<compile_context>
chip_gen: v7x
topology: tpu7x:2x2x1
jax: 0.10.0
libtpu: 0.0.40
codegen_flags: <defaults>
</compile_context>

<pallas_src>
import functools
import math

import jax
import jax.numpy as jnp
from jax.experimental import pallas as pl
from jax.experimental.pallas import tpu as pltpu

LANE = 128        # channel-like trailing dims pad to the lane width
BATCH_PAD = 8     # f32 sublane granule: batch pads to this
PIX_PAD = 16      # bf16 sublane granule: num_pixels pads to this (NOT 128)


def _round_up(x, m=LANE):
    return ((x + m - 1) // m) * m


# ----------------------------------------------------------------------------
# Fused per-step kernel: rnn_att projection + softmax attention + batched-MXU
# attention-weighted encoding + all stacked LSTM cells.  awe / h / c never
# leave VMEM between stages; one kernel launch per decode step.
# ----------------------------------------------------------------------------
def _decoder_step_kernel(*refs, num_layers, num_pixels):
    enc_ref, att1_ref, h_ref, w_rnn_ref, b_rnn_ref, w_full_ref = refs[:6]
    layer_refs = refs[6:6 + 5 * num_layers]
    out_refs = refs[6 + 5 * num_layers:]
    alpha_ref = out_refs[0]
    hc_refs = out_refs[1:]

    f32 = jnp.float32
    mxu_dtype = enc_ref.dtype                 # bf16 (or f32 escape hatch)

    enc = enc_ref[...]                        # (Bp, Np, Cp)  bf16
    att1 = att1_ref[...]                      # (Bp, Np, Ap)  f32, hoisted
    h_top = h_ref[...]                        # (Bp, Hlp)     f32
    Bp, Np, _ = att1.shape

    # rnn_att projection (depends on prev_hidden -> must run every step).
    att2 = jnp.dot(h_top.astype(mxu_dtype), w_rnn_ref[...],
                   preferred_element_type=f32) + b_rnn_ref[...]   # (Bp, Ap)

    # full_att as VPU multiply + lane reduce (no 1-wide MXU matmul).
    # b_full is dropped: softmax is shift-invariant, so alpha is unchanged.
    s = jnp.maximum(att1 + att2[:, None, :], 0.0)                 # (Bp,Np,Ap)
    e = jnp.sum(s * w_full_ref[...], axis=-1)                     # (Bp, Np)

    if Np > num_pixels:  # mask padded pixels out of the softmax
        pix = jax.lax.broadcasted_iota(jnp.int32, (Bp, Np), 1)
        e = jnp.where(pix < num_pixels, e, jnp.float32(-1e30))

    # softmax over pixels (lane reduce); reciprocal on the EUP slot.
    m = jnp.max(e, axis=-1, keepdims=True)
    p = jnp.exp(e - m)
    alpha = p * pl.reciprocal(jnp.sum(p, axis=-1, keepdims=True), approx=True)
    alpha_ref[...] = alpha

    # attention-weighted encoding: batched MXU matmul, linear in batch:
    # (Bp, 1, Np) @ (Bp, Np, Cp) -> (Bp, 1, Cp).
    awe = jnp.einsum("bqn,bnc->bqc", alpha[:, None, :].astype(mxu_dtype), enc,
                     preferred_element_type=f32)[:, 0, :]          # (Bp, Cp)

    # ---- stacked LSTM cells (state stays in VMEM) ---------------------------
    # gates = x @ W_ih + h @ W_hh + b ; gate order i|f|g|o; gate blocks are
    # 128-aligned so the slices below are zero-cost.
    x = awe
    for i in range(num_layers):
        w_ih_ref, w_hh_ref, b_ref, hprev_ref, cprev_ref = \
            layer_refs[5 * i:5 * i + 5]
        Hp = hprev_ref.shape[1]
        h_prev = hprev_ref[...]
        c_prev = cprev_ref[...]

        gates = (jnp.dot(x.astype(mxu_dtype), w_ih_ref[...],
                         preferred_element_type=f32)
                 + jnp.dot(h_prev.astype(mxu_dtype), w_hh_ref[...],
                           preferred_element_type=f32)
                 + b_ref[...])                                     # (Bp, 4Hp)

        i_g = jax.nn.sigmoid(gates[:, 0 * Hp:1 * Hp])
        f_g = jax.nn.sigmoid(gates[:, 1 * Hp:2 * Hp])
        g_g = jnp.tanh(gates[:, 2 * Hp:3 * Hp])
        o_g = jax.nn.sigmoid(gates[:, 3 * Hp:4 * Hp])

        c_new = f_g * c_prev + i_g * g_g
        h_new = o_g * jnp.tanh(c_new)

        hc_refs[2 * i][...] = h_new
        hc_refs[2 * i + 1][...] = c_new
        x = h_new


# ----------------------------------------------------------------------------
# Parameter initialization (deterministic, PyTorch-like uniform fan-in scaling)
# ----------------------------------------------------------------------------
def _uniform(key, shape, bound):
    return jax.random.uniform(key, shape, jnp.float32, -bound, bound)


def init_params(key, encoder_channels, rnn_channels, attention_channels):
    last_channel = rnn_channels[-1]
    keys = jax.random.split(key, 6 + 3 * len(rnn_channels))
    ka = keys[:6]

    b_att_e = 1.0 / jnp.sqrt(encoder_channels)
    b_att_r = 1.0 / jnp.sqrt(last_channel)
    b_att_f = 1.0 / jnp.sqrt(attention_channels)
    attention = {
        "w_enc": _uniform(ka[0], (encoder_channels, attention_channels), b_att_e),
        "b_enc": _uniform(ka[1], (1, attention_channels), b_att_e),
        "w_rnn": _uniform(ka[2], (last_channel, attention_channels), b_att_r),
        "b_rnn": _uniform(ka[3], (1, attention_channels), b_att_r),
        "w_full": _uniform(ka[4], (attention_channels, 1), b_att_f),
        "b_full": _uniform(ka[5], (1, 1), b_att_f),
    }

    input_channels = [encoder_channels] + list(rnn_channels)
    lstm_layers = []
    for i, H in enumerate(rnn_channels):
        kin = keys[6 + 3 * i: 6 + 3 * (i + 1)]
        In = input_channels[i]
        bound = 1.0 / jnp.sqrt(H)
        # NOTE: single combined bias b (== b_ih + b_hh of torch.nn.LSTMCell);
        # gate column order is i|f|g|o.  When importing PyTorch checkpoints,
        # transpose (4H, In) -> (In, 4H) and sum the two biases in the loader.
        lstm_layers.append({
            "w_ih": _uniform(kin[0], (In, 4 * H), bound),
            "w_hh": _uniform(kin[1], (H, 4 * H), bound),
            "b": _uniform(kin[2], (1, 4 * H), bound),
        })
    return {"attention": attention, "lstm": lstm_layers}


# ----------------------------------------------------------------------------
# One-time repack of logical params into the fused-kernel layout.
# ----------------------------------------------------------------------------
def prepare_params(params, mxu_dtype=jnp.bfloat16):
    """Pad channel dims to multiples of 128 (lane-dense, 128-aligned gates),
    keep W_ih / W_hh separate (two-dot accumulation, no in-kernel concat),
    turn the full_att weight into a (1, Ap) row (VPU mul + lane reduce) and
    drop b_full (softmax shift-invariance).  MXU-facing weights are bf16."""
    att = params["attention"]
    C, A = att["w_enc"].shape
    Hl = att["w_rnn"].shape[0]
    Cp, Ap, Hlp = _round_up(C), _round_up(A), _round_up(Hl)

    def pad2(w, rp, cp):
        r, c = w.shape
        return jnp.pad(w, ((0, rp - r), (0, cp - c)))

    p_att = {
        "w_enc": pad2(att["w_enc"], Cp, Ap).astype(mxu_dtype),   # precompute only
        "b_enc": pad2(att["b_enc"], 1, Ap),                      # precompute only
        "w_rnn": pad2(att["w_rnn"], Hlp, Ap).astype(mxu_dtype),
        "b_rnn": pad2(att["b_rnn"], 1, Ap),
        "w_full": pad2(att["w_full"].T, 1, Ap),                  # (1, Ap) f32
    }

    layers = []
    prev_out_p = Cp  # padded width of the layer input (awe for layer 0)
    for lp in params["lstm"]:
        In, four_h = lp["w_ih"].shape
        H = four_h // 4
        Hp = _round_up(H)
        Inp = prev_out_p
        w_ih = jnp.zeros((Inp, 4 * Hp), jnp.float32)
        w_hh = jnp.zeros((Hp, 4 * Hp), jnp.float32)
        b = jnp.zeros((1, 4 * Hp), jnp.float32)
        for g in range(4):
            w_ih = w_ih.at[:In, g * Hp:g * Hp + H].set(lp["w_ih"][:, g * H:(g + 1) * H])
            w_hh = w_hh.at[:H, g * Hp:g * Hp + H].set(lp["w_hh"][:, g * H:(g + 1) * H])
            b = b.at[:, g * Hp:g * Hp + H].set(lp["b"][:, g * H:(g + 1) * H])
        layers.append({"w_ih": w_ih.astype(mxu_dtype),
                       "w_hh": w_hh.astype(mxu_dtype),
                       "b": b})
        prev_out_p = Hp
    return {"attention": p_att, "lstm": layers}


# ----------------------------------------------------------------------------
# Loop-invariant per-sequence precompute (hoisted out of the decode step):
# pad/cast encoder_out once and compute att1 = enc @ W_enc + b_enc once.
# ----------------------------------------------------------------------------
def precompute_encoder(prepared, encoder_out):
    att = prepared["attention"]
    Cp, _ = att["w_enc"].shape
    B, N, C = encoder_out.shape
    Bp = _round_up(B, BATCH_PAD)
    Np = _round_up(N, PIX_PAD)
    mxu_dtype = att["w_enc"].dtype
    enc = jnp.pad(encoder_out,
                  ((0, Bp - B), (0, Np - N), (0, Cp - C))).astype(mxu_dtype)
    att1 = jnp.einsum("bnc,ca->bna", enc, att["w_enc"],
                      preferred_element_type=jnp.float32) + att["b_enc"]
    return {"enc": enc, "att1": att1}


# ----------------------------------------------------------------------------
# One decode step (single fused pallas_call).
# ----------------------------------------------------------------------------
def decoder_step(prepared, enc_feats, prev_hidden, prev_internal_state, *,
                 num_pixels):
    """For an autoregressive loop: call precompute_encoder() once per sequence,
    then this per step (jit with num_pixels static)."""
    att = prepared["attention"]
    layers = prepared["lstm"]
    num_layers = len(layers)

    enc = enc_feats["enc"]                     # (Bp, Np, Cp) mxu dtype
    att1 = enc_feats["att1"]                   # (Bp, Np, Ap) f32
    Bp, Np, _ = enc.shape

    B, Hl = prev_hidden.shape
    Hlp = att["w_rnn"].shape[0]
    h_top = jnp.pad(prev_hidden, ((0, Bp - B), (0, Hlp - Hl)))

    layer_args = []
    hp_list, real_h = [], []
    for i, lp in enumerate(layers):
        Hp = lp["b"].shape[1] // 4
        hp_list.append(Hp)
        ph, pc = prev_internal_state[i]
        H = ph.shape[1]
        real_h.append(H)
        layer_args += [lp["w_ih"], lp["w_hh"], lp["b"],
                       jnp.pad(ph, ((0, Bp - B), (0, Hp - H))),
                       jnp.pad(pc, ((0, Bp - B), (0, Hp - H)))]

    vmem = pl.BlockSpec(memory_space=pltpu.MemorySpace.VMEM)
    out_shape = [jax.ShapeDtypeStruct((Bp, Np), jnp.float32)]
    for Hp in hp_list:
        out_shape += [jax.ShapeDtypeStruct((Bp, Hp), jnp.float32),
                      jax.ShapeDtypeStruct((Bp, Hp), jnp.float32)]

    inputs = (enc, att1, h_top, att["w_rnn"], att["b_rnn"], att["w_full"],
              *layer_args)
    n_in = len(inputs)

    # h/c outputs alias the padded previous-state inputs (no fresh HBM bufs).
    io_aliases = {}
    for i in range(num_layers):
        io_aliases[6 + 5 * i + 3] = 1 + 2 * i   # h_prev  -> h_new
        io_aliases[6 + 5 * i + 4] = 2 + 2 * i   # c_prev  -> c_new

    # Scoped-VMEM limit sized from the actually-resident buffers (+ headroom
    # for the s / gates temps), capped at 64 MiB to stay within v7x physical.
    resident = sum(int(x.size) * x.dtype.itemsize for x in inputs)
    resident += sum(math.prod(s.shape) * jnp.dtype(s.dtype).itemsize
                    for s in out_shape)
    vmem_limit = int(min(max(3 * resident + (4 << 20), 32 << 20), 64 << 20))

    outs = pl.pallas_call(
        functools.partial(_decoder_step_kernel,
                          num_layers=num_layers, num_pixels=num_pixels),
        out_shape=tuple(out_shape),
        in_specs=[vmem] * n_in,
        out_specs=tuple([vmem] * len(out_shape)),
        input_output_aliases=io_aliases,
        compiler_params=pltpu.CompilerParams(vmem_limit_bytes=vmem_limit),
    )(*inputs)

    alpha = outs[0][:B, :num_pixels]
    cur_internal_state = []
    for i in range(num_layers):
        H = real_h[i]
        cur_internal_state.append((outs[1 + 2 * i][:B, :H],
                                   outs[2 + 2 * i][:B, :H]))
    cur_h, cur_c = cur_internal_state[-1]
    return cur_h, cur_c, cur_internal_state, alpha


# ----------------------------------------------------------------------------
# DecoderWithAttention forward (matches the PyTorch module: one decode step).
# ----------------------------------------------------------------------------
@jax.jit
def decoder_with_attention_forward(prepared, encoder_out, prev_hidden,
                                   prev_internal_state):
    """
    encoder_out:         (B, num_pixels, encoder_channels)
    prev_hidden:         (B, rnn_channels[-1])
    prev_internal_state: list of (h_i, c_i), each (B, rnn_channels[i])
    returns (cur_input, cur_c, cur_internal_state, alpha)
    """
    enc_feats = precompute_encoder(prepared, encoder_out)
    return decoder_step(prepared, enc_feats, prev_hidden, prev_internal_state,
                        num_pixels=encoder_out.shape[1])


# ----------------------------------------------------------------------------
# Pure-JAX f32 reference (mirrors the PyTorch module) for a sanity check.
# ----------------------------------------------------------------------------
def _reference_forward(params, encoder_out, prev_hidden, prev_internal_state):
    att = params["attention"]
    att1 = jnp.einsum("bnc,ca->bna", encoder_out, att["w_enc"]) + att["b_enc"]
    att2 = prev_hidden @ att["w_rnn"] + att["b_rnn"]
    s = jnp.maximum(att1 + att2[:, None, :], 0.0)
    e = jnp.matmul(s, att["w_full"])[:, :, 0] + att["b_full"][0, 0]
    alpha = jax.nn.softmax(e, axis=1)
    awe = jnp.einsum("bn,bnc->bc", alpha, encoder_out)
    x = awe
    state = []
    for i, lp in enumerate(params["lstm"]):
        h_prev, c_prev = prev_internal_state[i]
        H = h_prev.shape[1]
        gates = x @ lp["w_ih"] + h_prev @ lp["w_hh"] + lp["b"]
        i_g = jax.nn.sigmoid(gates[:, 0 * H:1 * H])
        f_g = jax.nn.sigmoid(gates[:, 1 * H:2 * H])
        g_g = jnp.tanh(gates[:, 2 * H:3 * H])
        o_g = jax.nn.sigmoid(gates[:, 3 * H:4 * H])
        c_new = f_g * c_prev + i_g * g_g
        h_new = o_g * jnp.tanh(c_new)
        state.append((h_new, c_new))
        x = h_new
    return x, state[-1][1], state, alpha


# ----------------------------------------------------------------------------
if __name__ == "__main__":
    B = 2                    # batch
    N = 16                   # num_pixels (feature_size * feature_size)
    ENC = 32                 # encoder_channels
    RNN = [32, 32]           # rnn_channels (multilayer)
    ATT = 32                 # attention_channels

    root = jax.random.PRNGKey(0)
    k_par, k_enc, k_hid, k_state = jax.random.split(root, 4)

    params = init_params(k_par, ENC, RNN, ATT)
    prepared = prepare_params(params, mxu_dtype=jnp.bfloat16)

    encoder_out = jax.random.normal(k_enc, (B, N, ENC), jnp.float32)
    prev_hidden = jax.random.normal(k_hid, (B, RNN[-1]), jnp.float32)

    state_keys = jax.random.split(k_state, 2 * len(RNN))
    prev_internal_state = []
    for i, H in enumerate(RNN):
        h0 = jax.random.normal(state_keys[2 * i], (B, H), jnp.float32)
        c0 = jax.random.normal(state_keys[2 * i + 1], (B, H), jnp.float32)
        prev_internal_state.append((h0, c0))

    cur_h, cur_c, cur_state, alpha = decoder_with_attention_forward(
        prepared, encoder_out, prev_hidden, prev_internal_state)

    jax.block_until_ready(cur_h)
    jax.block_until_ready(cur_c)
    jax.block_until_ready(alpha)
    for h_i, c_i in cur_state:
        jax.block_until_ready(h_i)
        jax.block_until_ready(c_i)

    assert cur_h.shape == (B, RNN[-1])
    assert cur_c.shape == (B, RNN[-1])
    assert alpha.shape == (B, N)

    # Sanity check against the pure-JAX f32 reference (loose tolerance: MXU
    # operands are bf16 with f32 accumulation, approx reciprocal in softmax).
    r_h, r_c, r_state, r_alpha = _reference_forward(
        params, encoder_out, prev_hidden, prev_internal_state)
    tol = 5e-2
    assert float(jnp.max(jnp.abs(cur_h - r_h))) < tol
    assert float(jnp.max(jnp.abs(cur_c - r_c))) < tol
    assert float(jnp.max(jnp.abs(alpha - r_alpha))) < tol
    for (h_i, c_i), (rh_i, rc_i) in zip(cur_state, r_state):
        assert float(jnp.max(jnp.abs(h_i - rh_i))) < tol
        assert float(jnp.max(jnp.abs(c_i - rc_i))) < tol

    print("KERNEL_OK")
</pallas_src>

<mosaic_0001>
module attributes {stable_mosaic.version = 11 : i64} {
  func.func @_decoder_step_kernel(%arg0: memref<8x16x128xbf16, #tpu.memory_space<vmem>>, %arg1: memref<8x16x128xf32, #tpu.memory_space<vmem>>, %arg2: memref<8x128xf32, #tpu.memory_space<vmem>>, %arg3: memref<128x128xbf16, #tpu.memory_space<vmem>>, %arg4: memref<1x128xf32, #tpu.memory_space<vmem>>, %arg5: memref<1x128xf32, #tpu.memory_space<vmem>>, %arg6: memref<128x512xbf16, #tpu.memory_space<vmem>>, %arg7: memref<128x512xbf16, #tpu.memory_space<vmem>>, %arg8: memref<1x512xf32, #tpu.memory_space<vmem>>, %arg9: memref<8x128xf32, #tpu.memory_space<vmem>>, %arg10: memref<8x128xf32, #tpu.memory_space<vmem>>, %arg11: memref<128x512xbf16, #tpu.memory_space<vmem>>, %arg12: memref<128x512xbf16, #tpu.memory_space<vmem>>, %arg13: memref<1x512xf32, #tpu.memory_space<vmem>>, %arg14: memref<8x128xf32, #tpu.memory_space<vmem>>, %arg15: memref<8x128xf32, #tpu.memory_space<vmem>>, %arg16: memref<8x16xf32, #tpu.memory_space<vmem>>, %arg17: memref<8x128xf32, #tpu.memory_space<vmem>>, %arg18: memref<8x128xf32, #tpu.memory_space<vmem>>, %arg19: memref<8x128xf32, #tpu.memory_space<vmem>>, %arg20: memref<8x128xf32, #tpu.memory_space<vmem>>) attributes {dimension_semantics = [], scalar_prefetch = 0 : i64, scratch_operands = 0 : i64, tpu.core_type = #tpu.core_type<tc>} {
    %c0 = arith.constant 0 : index
    %c0_0 = arith.constant 0 : index
    %c0_1 = arith.constant 0 : index
    %0 = vector.load %arg0[%c0, %c0_0, %c0_1] : memref<8x16x128xbf16, #tpu.memory_space<vmem>>, vector<8x16x128xbf16>
    %c0_2 = arith.constant 0 : index
    %c0_3 = arith.constant 0 : index
    %c0_4 = arith.constant 0 : index
    %1 = vector.load %arg1[%c0_2, %c0_3, %c0_4] : memref<8x16x128xf32, #tpu.memory_space<vmem>>, vector<8x16x128xf32>
    %c0_5 = arith.constant 0 : index
    %c0_6 = arith.constant 0 : index
    %2 = vector.load %arg2[%c0_5, %c0_6] : memref<8x128xf32, #tpu.memory_space<vmem>>, vector<8x128xf32>
    %3 = arith.truncf %2 : vector<8x128xf32> to vector<8x128xbf16>
    %c0_7 = arith.constant 0 : index
    %c0_8 = arith.constant 0 : index
    %4 = vector.load %arg3[%c0_7, %c0_8] : memref<128x128xbf16, #tpu.memory_space<vmem>>, vector<128x128xbf16>
    %cst = arith.constant dense<0.000000e+00> : vector<8x128xf32>
    %5 = tpu.matmul %3, %4, %cst {dimension_numbers = #tpu.dot_dimension_numbers<[1], [0], [0], [1], [0, 0, 1, 1], [], []>} : vector<8x128xbf16>, vector<128x128xbf16>, vector<8x128xf32> -> vector<8x128xf32>
    %c0_9 = arith.constant 0 : index
    %c0_10 = arith.constant 0 : index
    %6 = vector.load %arg4[%c0_9, %c0_10] : memref<1x128xf32, #tpu.memory_space<vmem>>, vector<1x128xf32>
    %7 = vector.broadcast %6 : vector<1x128xf32> to vector<8x128xf32>
    %8 = arith.addf %5, %7 : vector<8x128xf32>
    %9 = vector.shape_cast %8 : vector<8x128xf32> to vector<8x1x128xf32>
    %10 = vector.broadcast %9 : vector<8x1x128xf32> to vector<8x16x128xf32>
    %11 = arith.addf %1, %10 : vector<8x16x128xf32>
    %cst_11 = arith.constant 0.000000e+00 : f32
    %12 = vector.broadcast %cst_11 : f32 to vector<8x16x128xf32>
    %13 = arith.maximumf %11, %12 : vector<8x16x128xf32>
    %c0_12 = arith.constant 0 : index
    %c0_13 = arith.constant 0 : index
    %14 = vector.load %arg5[%c0_12, %c0_13] : memref<1x128xf32, #tpu.memory_space<vmem>>, vector<1x128xf32>
    %15 = vector.shape_cast %14 : vector<1x128xf32> to vector<1x1x128xf32>
    %16 = vector.broadcast %15 : vector<1x1x128xf32> to vector<8x16x128xf32>
    %17 = arith.mulf %13, %16 : vector<8x16x128xf32>
    %cst_14 = arith.constant dense<0.000000e+00> : vector<8x16xf32>
    %18 = vector.multi_reduction <add>, %17, %cst_14 [2] : vector<8x16x128xf32> to vector<8x16xf32>
    %cst_15 = arith.constant dense<0xFF800000> : vector<8xf32>
    %19 = vector.multi_reduction <maximumf>, %18, %cst_15 [1] : vector<8x16xf32> to vector<8xf32>
    %20 = vector.shape_cast %19 : vector<8xf32> to vector<8x1xf32>
    %21 = vector.broadcast %20 : vector<8x1xf32> to vector<8x16xf32>
    %22 = arith.subf %18, %21 : vector<8x16xf32>
    %23 = math.exp %22 : vector<8x16xf32>
    %cst_16 = arith.constant dense<0.000000e+00> : vector<8xf32>
    %24 = vector.multi_reduction <add>, %23, %cst_16 [1] : vector<8x16xf32> to vector<8xf32>
    %25 = vector.shape_cast %24 : vector<8xf32> to vector<8x1xf32>
    %26 = tpu.reciprocal %25 {approx = true} : vector<8x1xf32> -> vector<8x1xf32>
    %27 = vector.broadcast %26 : vector<8x1xf32> to vector<8x16xf32>
    %28 = arith.mulf %23, %27 : vector<8x16xf32>
    %c0_17 = arith.constant 0 : index
    %c0_18 = arith.constant 0 : index
    %29 = vector.load %arg16[%c0_17, %c0_18] : memref<8x16xf32, #tpu.memory_space<vmem>>, vector<8x16xf32>
    tpu.vector_store %arg16[%c0_17, %c0_18], %28 {strides = array<i32>} : memref<8x16xf32, #tpu.memory_space<vmem>>, vector<8x16xf32>,
    %30 = vector.shape_cast %28 : vector<8x16xf32> to vector<8x1x16xf32>
    %31 = arith.truncf %30 : vector<8x1x16xf32> to vector<8x1x16xbf16>
    "tpu.trace_start"() <{level = 10 : i32, message = "bqn,bnc->bqc"}> : () -> ()
    %cst_19 = arith.constant dense<0.000000e+00> : vector<8x1x128xf32>
    %32 = tpu.matmul %31, %0, %cst_19 {dimension_numbers = #tpu.dot_dimension_numbers<[2], [1], [1], [2], [0, 0, 0, 1, 1, 2], [0], [0]>} : vector<8x1x16xbf16>, vector<8x16x128xbf16>, vector<8x1x128xf32> -> vector<8x1x128xf32>
    "tpu.trace_stop"() : () -> ()
    %33 = vector.shape_cast %32 : vector<8x1x128xf32> to vector<8x128xf32>
    %c0_20 = arith.constant 0 : index
    %c0_21 = arith.constant 0 : index
    %34 = vector.load %arg9[%c0_20, %c0_21] : memref<8x128xf32, #tpu.memory_space<vmem>>, vector<8x128xf32>
    %c0_22 = arith.constant 0 : index
    %c0_23 = arith.constant 0 : index
    %35 = vector.load %arg10[%c0_22, %c0_23] : memref<8x128xf32, #tpu.memory_space<vmem>>, vector<8x128xf32>
    %36 = arith.truncf %33 : vector<8x128xf32> to vector<8x128xbf16>
    %c0_24 = arith.constant 0 : index
    %c0_25 = arith.constant 0 : index
    %37 = vector.load %arg6[%c0_24, %c0_25] : memref<128x512xbf16, #tpu.memory_space<vmem>>, vector<128x512xbf16>
    %cst_26 = arith.constant dense<0.000000e+00> : vector<8x512xf32>
    %38 = tpu.matmul %36, %37, %cst_26 {dimension_numbers = #tpu.dot_dimension_numbers<[1], [0], [0], [1], [0, 0, 1, 1], [], []>} : vector<8x128xbf16>, vector<128x512xbf16>, vector<8x512xf32> -> vector<8x512xf32>
    %39 = arith.truncf %34 : vector<8x128xf32> to vector<8x128xbf16>
    %c0_27 = arith.constant 0 : index
    %c0_28 = arith.constant 0 : index
    %40 = vector.load %arg7[%c0_27, %c0_28] : memref<128x512xbf16, #tpu.memory_space<vmem>>, vector<128x512xbf16>
    %cst_29 = arith.constant dense<0.000000e+00> : vector<8x512xf32>
    %41 = tpu.matmul %39, %40, %cst_29 {dimension_numbers = #tpu.dot_dimension_numbers<[1], [0], [0], [1], [0, 0, 1, 1], [], []>} : vector<8x128xbf16>, vector<128x512xbf16>, vector<8x512xf32> -> vector<8x512xf32>
    %42 = arith.addf %38, %41 : vector<8x512xf32>
    %c0_30 = arith.constant 0 : index
    %c0_31 = arith.constant 0 : index
    %43 = vector.load %arg8[%c0_30, %c0_31] : memref<1x512xf32, #tpu.memory_space<vmem>>, vector<1x512xf32>
    %44 = vector.broadcast %43 : vector<1x512xf32> to vector<8x512xf32>
    %45 = arith.addf %42, %44 : vector<8x512xf32>
    %46 = vector.extract_strided_slice %45 {offsets = [0, 0], sizes = [8, 128], strides = [1, 1]} : vector<8x512xf32> to vector<8x128xf32>
    %47 = arith.negf %46 : vector<8x128xf32>
    %48 = math.exp %47 : vector<8x128xf32>
    %cst_32 = arith.constant 1.000000e+00 : f32
    %49 = vector.broadcast %cst_32 : f32 to vector<8x128xf32>
    %50 = arith.addf %49, %48 : vector<8x128xf32>
    %51 = arith.divf %49, %50 : vector<8x128xf32>
    %52 = vector.extract_strided_slice %45 {offsets = [0, 128], sizes = [8, 128], strides = [1, 1]} : vector<8x512xf32> to vector<8x128xf32>
    %53 = arith.negf %52 : vector<8x128xf32>
    %54 = math.exp %53 : vector<8x128xf32>
    %cst_33 = arith.constant 1.000000e+00 : f32
    %55 = vector.broadcast %cst_33 : f32 to vector<8x128xf32>
    %56 = arith.addf %55, %54 : vector<8x128xf32>
    %57 = arith.divf %55, %56 : vector<8x128xf32>
    %58 = vector.extract_strided_slice %45 {offsets = [0, 256], sizes = [8, 128], strides = [1, 1]} : vector<8x512xf32> to vector<8x128xf32>
    %59 = math.tanh %58 : vector<8x128xf32>
    %60 = vector.extract_strided_slice %45 {offsets = [0, 384], sizes = [8, 128], strides = [1, 1]} : vector<8x512xf32> to vector<8x128xf32>
    %61 = arith.negf %60 : vector<8x128xf32>
    %62 = math.exp %61 : vector<8x128xf32>
    %cst_34 = arith.constant 1.000000e+00 : f32
    %63 = vector.broadcast %cst_34 : f32 to vector<8x128xf32>
    %64 = arith.addf %63, %62 : vector<8x128xf32>
    %65 = arith.divf %63, %64 : vector<8x128xf32>
    %66 = arith.mulf %57, %35 : vector<8x128xf32>
    %67 = arith.mulf %51, %59 : vector<8x128xf32>
    %68 = arith.addf %66, %67 : vector<8x128xf32>
    %69 = math.tanh %68 : vector<8x128xf32>
    %70 = arith.mulf %65, %69 : vector<8x128xf32>
    %c0_35 = arith.constant 0 : index
    %c0_36 = arith.constant 0 : index
    %71 = vector.load %arg17[%c0_35, %c0_36] : memref<8x128xf32, #tpu.memory_space<vmem>>, vector<8x128xf32>
    tpu.vector_store %arg17[%c0_35, %c0_36], %70 {strides = array<i32>} : memref<8x128xf32, #tpu.memory_space<vmem>>, vector<8x128xf32>,
    %c0_37 = arith.constant 0 : index
    %c0_38 = arith.constant 0 : index
    %72 = vector.load %arg18[%c0_37, %c0_38] : memref<8x128xf32, #tpu.memory_space<vmem>>, vector<8x128xf32>
    tpu.vector_store %arg18[%c0_37, %c0_38], %68 {strides = array<i32>} : memref<8x128xf32, #tpu.memory_space<vmem>>, vector<8x128xf32>,
    %c0_39 = arith.constant 0 : index
    %c0_40 = arith.constant 0 : index
    %73 = vector.load %arg14[%c0_39, %c0_40] : memref<8x128xf32, #tpu.memory_space<vmem>>, vector<8x128xf32>
    %c0_41 = arith.constant 0 : index
    %c0_42 = arith.constant 0 : index
    %74 = vector.load %arg15[%c0_41, %c0_42] : memref<8x128xf32, #tpu.memory_space<vmem>>, vector<8x128xf32>
    %75 = arith.truncf %70 : vector<8x128xf32> to vector<8x128xbf16>
    %c0_43 = arith.constant 0 : index
    %c0_44 = arith.constant 0 : index
    %76 = vector.load %arg11[%c0_43, %c0_44] : memref<128x512xbf16, #tpu.memory_space<vmem>>, vector<128x512xbf16>
    %cst_45 = arith.constant dense<0.000000e+00> : vector<8x512xf32>
    %77 = tpu.matmul %75, %76, %cst_45 {dimension_numbers = #tpu.dot_dimension_numbers<[1], [0], [0], [1], [0, 0, 1, 1], [], []>} : vector<8x128xbf16>, vector<128x512xbf16>, vector<8x512xf32> -> vector<8x512xf32>
    %78 = arith.truncf %73 : vector<8x128xf32> to vector<8x128xbf16>
    %c0_46 = arith.constant 0 : index
    %c0_47 = arith.constant 0 : index
    %79 = vector.load %arg12[%c0_46, %c0_47] : memref<128x512xbf16, #tpu.memory_space<vmem>>, vector<128x512xbf16>
    %cst_48 = arith.constant dense<0.000000e+00> : vector<8x512xf32>
    %80 = tpu.matmul %78, %79, %cst_48 {dimension_numbers = #tpu.dot_dimension_numbers<[1], [0], [0], [1], [0, 0, 1, 1], [], []>} : vector<8x128xbf16>, vector<128x512xbf16>, vector<8x512xf32> -> vector<8x512xf32>
    %81 = arith.addf %77, %80 : vector<8x512xf32>
    %c0_49 = arith.constant 0 : index
    %c0_50 = arith.constant 0 : index
    %82 = vector.load %arg13[%c0_49, %c0_50] : memref<1x512xf32, #tpu.memory_space<vmem>>, vector<1x512xf32>
    %83 = vector.broadcast %82 : vector<1x512xf32> to vector<8x512xf32>
    %84 = arith.addf %81, %83 : vector<8x512xf32>
    %85 = vector.extract_strided_slice %84 {offsets = [0, 0], sizes = [8, 128], strides = [1, 1]} : vector<8x512xf32> to vector<8x128xf32>
    %86 = arith.negf %85 : vector<8x128xf32>
    %87 = math.exp %86 : vector<8x128xf32>
    %cst_51 = arith.constant 1.000000e+00 : f32
    %88 = vector.broadcast %cst_51 : f32 to vector<8x128xf32>
    %89 = arith.addf %88, %87 : vector<8x128xf32>
    %90 = arith.divf %88, %89 : vector<8x128xf32>
    %91 = vector.extract_strided_slice %84 {offsets = [0, 128], sizes = [8, 128], strides = [1, 1]} : vector<8x512xf32> to vector<8x128xf32>
    %92 = arith.negf %91 : vector<8x128xf32>
    %93 = math.exp %92 : vector<8x128xf32>
    %cst_52 = arith.constant 1.000000e+00 : f32
    %94 = vector.broadcast %cst_52 : f32 to vector<8x128xf32>
    %95 = arith.addf %94, %93 : vector<8x128xf32>
    %96 = arith.divf %94, %95 : vector<8x128xf32>
    %97 = vector.extract_strided_slice %84 {offsets = [0, 256], sizes = [8, 128], strides = [1, 1]} : vector<8x512xf32> to vector<8x128xf32>
    %98 = math.tanh %97 : vector<8x128xf32>
    %99 = vector.extract_strided_slice %84 {offsets = [0, 384], sizes = [8, 128], strides = [1, 1]} : vector<8x512xf32> to vector<8x128xf32>
    %100 = arith.negf %99 : vector<8x128xf32>
    %101 = math.exp %100 : vector<8x128xf32>
    %cst_53 = arith.constant 1.000000e+00 : f32
    %102 = vector.broadcast %cst_53 : f32 to vector<8x128xf32>
    %103 = arith.addf %102, %101 : vector<8x128xf32>
    %104 = arith.divf %102, %103 : vector<8x128xf32>
    %105 = arith.mulf %96, %74 : vector<8x128xf32>
    %106 = arith.mulf %90, %98 : vector<8x128xf32>
    %107 = arith.addf %105, %106 : vector<8x128xf32>
    %108 = math.tanh %107 : vector<8x128xf32>
    %109 = arith.mulf %104, %108 : vector<8x128xf32>
    %c0_54 = arith.constant 0 : index
    %c0_55 = arith.constant 0 : index
    %110 = vector.load %arg19[%c0_54, %c0_55] : memref<8x128xf32, #tpu.memory_space<vmem>>, vector<8x128xf32>
    tpu.vector_store %arg19[%c0_54, %c0_55], %109 {strides = array<i32>} : memref<8x128xf32, #tpu.memory_space<vmem>>, vector<8x128xf32>,
    %c0_56 = arith.constant 0 : index
    %c0_57 = arith.constant 0 : index
    %111 = vector.load %arg20[%c0_56, %c0_57] : memref<8x128xf32, #tpu.memory_space<vmem>>, vector<8x128xf32>
    tpu.vector_store %arg20[%c0_56, %c0_57], %107 {strides = array<i32>} : memref<8x128xf32, #tpu.memory_space<vmem>>, vector<8x128xf32>,
    return
  }
}

</mosaic_0001>

<llo_original>
// kernel: decoder_with_attention_forward.1
$region0: #{decoder_with_attention_forward.1}
  #allocation0 [shape = 'u32[]', space=smem, size = 0x4, offset = 0x4, fixed_abs, tag = 'smem constant byte address 0x4 - core index']
  #allocation1 [shape = 'u32[144,128]{1,0:T(1,128)}', space=vmem, size = 0x12000, scoped, tag = 'internal scratch']
  %s0 = inlined_call_operand.vmem [shape: bf16[8,16,128], index: 0, kind: input, shape index: {}]
  %s1 = inlined_call_operand.vmem [shape: f32[8,16,128], index: 1, kind: input, shape index: {}]
  %s2 = inlined_call_operand.vmem [shape: f32[8,128], index: 2, kind: input, shape index: {}]
  %s3 = inlined_call_operand.vmem [shape: bf16[128,128], index: 3, kind: input, shape index: {}]
  %s4 = inlined_call_operand.vmem [shape: f32[1,128], index: 4, kind: input, shape index: {}]
  %s5 = inlined_call_operand.vmem [shape: f32[1,128], index: 5, kind: input, shape index: {}]
  %s6 = inlined_call_operand.vmem [shape: bf16[128,512], index: 6, kind: input, shape index: {}]
  %s7 = inlined_call_operand.hbm [shape: bf16[128,512], index: 7, kind: input, shape index: {}]
  %s8 = inlined_call_operand.vmem [shape: f32[1,512], index: 8, kind: input, shape index: {}]
  %s9 = inlined_call_operand.vmem [shape: f32[8,128], index: 9, kind: input, shape index: {}, may-alias: {9,17}]
  %s10 = inlined_call_operand.vmem [shape: f32[8,128], index: 10, kind: input, shape index: {}, may-alias: {10,18}]
  %s11 = inlined_call_operand.hbm [shape: bf16[128,512], index: 11, kind: input, shape index: {}]
  %s12 = inlined_call_operand.hbm [shape: bf16[128,512], index: 12, kind: input, shape index: {}]
  %s13 = inlined_call_operand.vmem [shape: f32[1,512], index: 13, kind: input, shape index: {}]
  %s14 = inlined_call_operand.vmem [shape: f32[8,128], index: 14, kind: input, shape index: {}, may-alias: {14,19}]
  %s15 = inlined_call_operand.vmem [shape: f32[8,128], index: 15, kind: input, shape index: {}, may-alias: {15,20}]
  %s16 = inlined_call_operand.vmem [shape: f32[8,16], index: 16, kind: output, shape index: {0}]
  %s17 = inlined_call_operand.vmem [shape: f32[8,128], index: 17, kind: output, shape index: {1}, may-alias: {9,17}]
  %s18 = inlined_call_operand.vmem [shape: f32[8,128], index: 18, kind: output, shape index: {2}, may-alias: {10,18}]
  %s19 = inlined_call_operand.vmem [shape: f32[8,128], index: 19, kind: output, shape index: {3}, may-alias: {14,19}]
  %s20 = inlined_call_operand.vmem [shape: f32[8,128], index: 20, kind: output, shape index: {4}, may-alias: {15,20}]
  %21 = xla_tuple %s16, %s17, %s18, %s19, %s20
  %s22 = sld [smem:[#allocation0]]
  $region118: #{decoder_with_attention_forward.1} parent=0
    _
  %s24 = ssub.s32 1, %s22
  %s25 = scalar_select 0, %s24, %s22
  $region1: #{decoder_with_attention_forward.1} parent=0
    #allocation2 [shape = 'u8[131072]{0}', space=vmem, size = 0x20000, scoped, tag = 'input window, operand 7, single buffered']
    #allocation3 [shape = 's32[1]{0}', space=sflag, size = 0x4, scoped, tag = 'scoped memory for decoder_with_attention_forward.1']
    #allocation4 [shape = 'u8[131072]{0}', space=vmem, size = 0x20000, scoped, tag = 'input window, operand 11, single buffered']
    #allocation5 [shape = 's32[1]{0}', space=sflag, size = 0x4, scoped, tag = 'scoped memory for decoder_with_attention_forward.1']
    #allocation6 [shape = 'u8[131072]{0}', space=vmem, size = 0x20000, scoped, tag = 'input window, operand 12, single buffered']
    %26 = vsyncpa [#allocation3], 0
    %27 = vsyncpa [#allocation5], 0
    // Predicated region
    $region2: #{decoder_with_attention_forward.1} parent=1 // pred_check
      _
    $region3: #{decoder_with_attention_forward.1} parent=1 // pred_check_branch
      %29 = sbr.rel (0) target = $region5
    $region4: #{decoder_with_attention_forward.1} parent=1 // pred_region
      _
    $region5: #{decoder_with_attention_forward.1} parent=1 // pred_fallthru
      _
    // Predicated region
    $region6: #{decoder_with_attention_forward.1} parent=1 // pred_check
      _
    $region7: #{decoder_with_attention_forward.1} parent=1 // pred_check_branch
      %31 = sbr.rel (0) target = $region9
    $region8: #{decoder_with_attention_forward.1} parent=1 // pred_region
      _
    $region9: #{decoder_with_attention_forward.1} parent=1 // pred_fallthru
      _
    // Predicated region
    $region10: #{decoder_with_attention_forward.1} parent=1 // pred_check
      _
    $region11: #{decoder_with_attention_forward.1} parent=1 // pred_check_branch
      %33 = sbr.rel (0) target = $region13
    $region12: #{decoder_with_attention_forward.1} parent=1 // pred_region
      _
    $region13: #{decoder_with_attention_forward.1} parent=1 // pred_fallthru
      _
    // Predicated region
    $region14: #{decoder_with_attention_forward.1} parent=1 // pred_check
      _
    $region15: #{decoder_with_attention_forward.1} parent=1 // pred_check_branch
      %35 = sbr.rel (0) target = $region17
    $region16: #{decoder_with_attention_forward.1} parent=1 // pred_region
      _
    $region17: #{decoder_with_attention_forward.1} parent=1 // pred_fallthru
      _
    // Predicated region
    $region18: #{decoder_with_attention_forward.1} parent=1 // pred_check
      _
    $region19: #{decoder_with_attention_forward.1} parent=1 // pred_check_branch
      %37 = sbr.rel (0) target = $region21
    $region20: #{decoder_with_attention_forward.1} parent=1 // pred_region
      _
    $region21: #{decoder_with_attention_forward.1} parent=1 // pred_fallthru
      _
    // Predicated region
    $region22: #{decoder_with_attention_forward.1} parent=1 // pred_check
      _
    $region23: #{decoder_with_attention_forward.1} parent=1 // pred_check_branch
      %39 = sbr.rel (0) target = $region25
    $region24: #{decoder_with_attention_forward.1} parent=1 // pred_region
      _
    $region25: #{decoder_with_attention_forward.1} parent=1 // pred_fallthru
      _
    // Predicated region
    $region26: #{decoder_with_attention_forward.1} parent=1 // pred_check
      _
    $region27: #{decoder_with_attention_forward.1} parent=1 // pred_check_branch
      %41 = sbr.rel (0) target = $region29
    $region28: #{decoder_with_attention_forward.1} parent=1 // pred_region
      _
    $region29: #{decoder_with_attention_forward.1} parent=1 // pred_fallthru
      _
    // Predicated region
    $region30: #{decoder_with_attention_forward.1} parent=1 // pred_check
      _
    $region31: #{decoder_with_attention_forward.1} parent=1 // pred_check_branch
      %43 = sbr.rel (0) target = $region33
    $region32: #{decoder_with_attention_forward.1} parent=1 // pred_region
      %s45 = ssub.s32 4096, 4096
      %46 = vsyncadd [#allocation3], %s45
      %s47 = sshll.u32 [#allocation2], 4
      %s48 = int_to_ptr.vmem [resolvable:$true] %s47
      %53 = dma.hbm_to_vmem [thread:$0]  %s7, 4096, %s48, [#allocation3], 256, 256, 16
    $region33: #{decoder_with_attention_forward.1} parent=1 // pred_fallthru
      _
    // Predicated region
    $region34: #{decoder_with_attention_forward.1} parent=1 // pred_check
      _
    $region35: #{decoder_with_attention_forward.1} parent=1 // pred_check_branch
      %55 = sbr.rel (0) target = $region37
    $region36: #{decoder_with_attention_forward.1} parent=1 // pred_region
      _
    $region37: #{decoder_with_attention_forward.1} parent=1 // pred_fallthru
      _
    // Predicated region
    $region38: #{decoder_with_attention_forward.1} parent=1 // pred_check
      _
    $region39: #{decoder_with_attention_forward.1} parent=1 // pred_check_branch
      %57 = sbr.rel (0) target = $region41
    $region40: #{decoder_with_attention_forward.1} parent=1 // pred_region
      _
    $region41: #{decoder_with_attention_forward.1} parent=1 // pred_fallthru
      _
    // Predicated region
    $region42: #{decoder_with_attention_forward.1} parent=1 // pred_check
      _
    $region43: #{decoder_with_attention_forward.1} parent=1 // pred_check_branch
      %59 = sbr.rel (0) target = $region45
    $region44: #{decoder_with_attention_forward.1} parent=1 // pred_region
      _
    $region45: #{decoder_with_attention_forward.1} parent=1 // pred_fallthru
      _
    // Predicated region
    $region46: #{decoder_with_attention_forward.1} parent=1 // pred_check
      _
    $region47: #{decoder_with_attention_forward.1} parent=1 // pred_check_branch
      %61 = sbr.rel (0) target = $region49
    $region48: #{decoder_with_attention_forward.1} parent=1 // pred_region
      %s63 = ssub.s32 4096, 4096
      %64 = vsyncadd [#allocation5], %s63
      %s65 = sshll.u32 [#allocation4], 4
      %s66 = int_to_ptr.vmem [resolvable:$true] %s65
      %71 = dma.hbm_to_vmem [thread:$0]  %s11, 4096, %s66, [#allocation5], 256, 256, 16
    $region49: #{decoder_with_attention_forward.1} parent=1 // pred_fallthru
      _
    // Predicated region
    $region50: #{decoder_with_attention_forward.1} parent=1 // pred_check
      _
    $region51: #{decoder_with_attention_forward.1} parent=1 // pred_check_branch
      %73 = sbr.rel (0) target = $region53
    $region52: #{decoder_with_attention_forward.1} parent=1 // pred_region
      %s75 = ssub.s32 4096, 4096
      %76 = vsyncadd [#allocation5], %s75
      %s77 = sshll.u32 [#allocation6], 4
      %s78 = int_to_ptr.vmem [resolvable:$true] %s77
      %83 = dma.hbm_to_vmem [thread:$0]  %s12, 4096, %s78, [#allocation5], 256, 256, 16
    $region53: #{decoder_with_attention_forward.1} parent=1 // pred_fallthru
      _
    // Predicated region
    $region54: #{decoder_with_attention_forward.1} parent=1 // pred_check
      _
    $region55: #{decoder_with_attention_forward.1} parent=1 // pred_check_branch
      %85 = sbr.rel (0) target = $region57
    $region56: #{decoder_with_attention_forward.1} parent=1 // pred_region
      _
    $region57: #{decoder_with_attention_forward.1} parent=1 // pred_fallthru
      _
    // Predicated region
    $region58: #{decoder_with_attention_forward.1} parent=1 // pred_check
      _
    $region59: #{decoder_with_attention_forward.1} parent=1 // pred_check_branch
      %87 = sbr.rel (0) target = $region61
    $region60: #{decoder_with_attention_forward.1} parent=1 // pred_region
      _
    $region61: #{decoder_with_attention_forward.1} parent=1 // pred_fallthru
      _
    // Predicated region
    $region62: #{decoder_with_attention_forward.1} parent=1 // pred_check
      _
    $region63: #{decoder_with_attention_forward.1} parent=1 // pred_check_branch
      %89 = sbr.rel (0) target = $region65
    $region64: #{decoder_with_attention_forward.1} parent=1 // pred_region
      _
    $region65: #{decoder_with_attention_forward.1} parent=1 // pred_fallthru
      _
    // Predicated region
    $region66: #{decoder_with_attention_forward.1} parent=1 // pred_check
      _
    $region67: #{decoder_with_attention_forward.1} parent=1 // pred_check_branch
      %91 = sbr.rel (0) target = $region69
    $region68: #{decoder_with_attention_forward.1} parent=1 // pred_region
      %92 = dma.done [#allocation3], 4096
    $region69: #{decoder_with_attention_forward.1} parent=1 // pred_fallthru
      _
    // Predicated region
    $region70: #{decoder_with_attention_forward.1} parent=1 // pred_check
      _
    $region71: #{decoder_with_attention_forward.1} parent=1 // pred_check_branch
      %94 = sbr.rel (0) target = $region73
    $region72: #{decoder_with_attention_forward.1} parent=1 // pred_region
      %95 = dma.done [#allocation5], 4096
    $region73: #{decoder_with_attention_forward.1} parent=1 // pred_fallthru
      _
    // Predicated region
    $region74: #{decoder_with_attention_forward.1} parent=1 // pred_check
      _
    $region75: #{decoder_with_attention_forward.1} parent=1 // pred_check_branch
      %97 = sbr.rel (0) target = $region77
    $region76: #{decoder_with_attention_forward.1} parent=1 // pred_region
      %98 = dma.done [#allocation5], 4096
    $region77: #{decoder_with_attention_forward.1} parent=1 // pred_fallthru
      _
    %v100 = vld [vmem:[%s0] sm:$0xf]
    %v101 = vld [vmem:[%s0 + $0x4] sm:$0xf]
    %v102 = vld [vmem:[%s0 + $0x8] sm:$0xf]
    %v103 = vld [vmem:[%s0 + $0xc] sm:$0xf]
    %v104 = vld [vmem:[%s0 + $0x10] sm:$0xf]
    %v105 = vld [vmem:[%s0 + $0x14] sm:$0xf]
    %v106 = vld [vmem:[%s0 + $0x18] sm:$0xf]
    %v107 = vld [vmem:[%s0 + $0x1c] sm:$0xf]
    %v108 = vld [vmem:[%s0 + $0x20] sm:$0xf]
    %v109 = vld [vmem:[%s0 + $0x24] sm:$0xf]
    %v110 = vld [vmem:[%s0 + $0x28] sm:$0xf]
    %v111 = vld [vmem:[%s0 + $0x2c] sm:$0xf]
    %v112 = vld [vmem:[%s0 + $0x30] sm:$0xf]
    %v113 = vld [vmem:[%s0 + $0x34] sm:$0xf]
    %v114 = vld [vmem:[%s0 + $0x38] sm:$0xf]
    %v115 = vld [vmem:[%s0 + $0x3c] sm:$0xf]
    %v116 = vld [vmem:[%s1] sm:$0xff]
    %v117 = vld [vmem:[%s1 + $0x8] sm:$0xff]
    %v118 = vld [vmem:[%s1 + $0x10] sm:$0xff]
    %v119 = vld [vmem:[%s1 + $0x18] sm:$0xff]
    %v120 = vld [vmem:[%s1 + $0x20] sm:$0xff]
    %v121 = vld [vmem:[%s1 + $0x28] sm:$0xff]
    %v122 = vld [vmem:[%s1 + $0x30] sm:$0xff]
    %v123 = vld [vmem:[%s1 + $0x38] sm:$0xff]
    %v124 = vld [vmem:[%s1 + $0x40] sm:$0xff]
    %v125 = vld [vmem:[%s1 + $0x48] sm:$0xff]
    %v126 = vld [vmem:[%s1 + $0x50] sm:$0xff]
    %v127 = vld [vmem:[%s1 + $0x58] sm:$0xff]
    %v128 = vld [vmem:[%s1 + $0x60] sm:$0xff]
    %v129 = vld [vmem:[%s1 + $0x68] sm:$0xff]
    %v130 = vld [vmem:[%s1 + $0x70] sm:$0xff]
    %v131 = vld [vmem:[%s1 + $0x78] sm:$0xff]
    %v132 = vld [vmem:[%s2] sm:$0xff]
    %v133 = vpack.c.bf16 %v132, %v132
    %v134 = vld [vmem:[%s3] sm:$0xf]
    %v135 = vld [vmem:[%s3 + $0x4] sm:$0xf]
    %v136 = vld [vmem:[%s3 + $0x8] sm:$0xf]
    %v137 = vld [vmem:[%s3 + $0xc] sm:$0xf]
    %v138 = vld [vmem:[%s3 + $0x10] sm:$0xf]
    %v139 = vld [vmem:[%s3 + $0x14] sm:$0xf]
    %v140 = vld [vmem:[%s3 + $0x18] sm:$0xf]
    %v141 = vld [vmem:[%s3 + $0x1c] sm:$0xf]
    %v142 = vld [vmem:[%s3 + $0x20] sm:$0xf]
    %v143 = vld [vmem:[%s3 + $0x24] sm:$0xf]
    %v144 = vld [vmem:[%s3 + $0x28] sm:$0xf]
    %v145 = vld [vmem:[%s3 + $0x2c] sm:$0xf]
    %v146 = vld [vmem:[%s3 + $0x30] sm:$0xf]
    %v147 = vld [vmem:[%s3 + $0x34] sm:$0xf]
    %v148 = vld [vmem:[%s3 + $0x38] sm:$0xf]
    %v149 = vld [vmem:[%s3 + $0x3c] sm:$0xf]
    %v150 = vld [vmem:[%s4] sm:$0x1]
    %v152 = vlaneseq
    %v153 = vshrl.u32 %v152, 7
    %v154 = vsub.s32 0, %v153
    %v155 = vrot.slane %v150, %v154
    %v173 = vunpack.c.l.b16 %v134
    %v174 = vunpack.c.l.b16 %v135
    %v175 = vunpack.c.l.b16 %v136
    %v176 = vunpack.c.l.b16 %v137
    %v177 = vunpack.c.l.b16 %v138
    %v178 = vunpack.c.l.b16 %v139
    %v179 = vunpack.c.l.b16 %v140
    %v180 = vunpack.c.l.b16 %v141
    %v181 = vunpack.c.l.b16 %v142
    %v182 = vunpack.c.l.b16 %v143
    %v183 = vunpack.c.l.b16 %v144
    %v184 = vunpack.c.l.b16 %v145
    %v185 = vunpack.c.l.b16 %v146
    %v186 = vunpack.c.l.b16 %v147
    %v187 = vunpack.c.l.b16 %v148
    %v188 = vunpack.c.l.b16 %v149
    %v189 = vpack.c.b16 %v174, %v173
    %v190 = vpack.c.b16 %v176, %v175
    %v191 = vpack.c.b16 %v178, %v177
    %v192 = vpack.c.b16 %v180, %v179
    %v193 = vpack.c.b16 %v182, %v181
    %v194 = vpack.c.b16 %v184, %v183
    %v195 = vpack.c.b16 %v186, %v185
    %v196 = vpack.c.b16 %v188, %v187
    %205 = vmatprep.subr.bf16.mxu0 0
    %206 = vmatpush1.bf16.msra.mxu0 %v189
    %207 = vmatprep.subr.bf16.mxu0 0
    %208 = vmatpush1.bf16.msra.mxu0 %v190
    %209 = vmatprep.subr.bf16.mxu0 0
    %210 = vmatpush1.bf16.msra.mxu0 %v191
    %211 = vmatprep.subr.bf16.mxu0 0
    %212 = vmatpush1.bf16.msra.mxu0 %v192
    %213 = vmatprep.subr.bf16.mxu0 0
    %214 = vmatpush1.bf16.msra.mxu0 %v193
    %215 = vmatprep.subr.bf16.mxu0 0
    %216 = vmatpush1.bf16.msra.mxu0 %v194
    %217 = vmatprep.subr.bf16.mxu0 0
    %218 = vmatpush1.bf16.msra.mxu0 %v195
    %219 = vmatprep.subr.bf16.mxu0 0
    %220 = vmatpush1.bf16.msra.mxu0 %v196
    %221 = vmatprep.subr.bf16.mxu0 0
    %222 = vmatpush1.bf16.msra.mxu0 0
    %223 = vmatprep.subr.bf16.mxu0 0
    %224 = vmatpush1.bf16.msra.mxu0 0
    %225 = vmatprep.subr.bf16.mxu0 0
    %226 = vmatpush1.bf16.msra.mxu0 0
    %227 = vmatprep.subr.bf16.mxu0 0
    %228 = vmatpush1.bf16.msra.mxu0 0
    %229 = vmatprep.subr.bf16.mxu0 0
    %230 = vmatpush1.bf16.msra.mxu0 0
    %231 = vmatprep.subr.bf16.mxu0 0
    %232 = vmatpush1.bf16.msra.mxu0 0
    %233 = vmatprep.subr.bf16.mxu0 0
    %234 = vmatpush1.bf16.msra.mxu0 0
    %235 = vmatprep.subr.bf16.mxu0 0
    %236 = vmatpush1.bf16.msra.mxu0 0
    %237 = vmatprep.mubr.bf16.mxu0 0
    %238 = vmatmul.mubr.bf16.gmra.mrb[0].mxu0 %v133
    %v239 = vpop.f32.mrb[0].mxu0
    %v240 = vadd.f32 %v155, %v239
    %v241 = vpop.f32.mrb[0].mxu0
    %v242 = vpop.f32.mrb[0].mxu0
    %v243 = vpop.f32.mrb[0].mxu0
    %244 = vdwg.mxu0
    %v246 = vcombine.high %v240, %v240
    %v248 = vunpack.c.l.s4 1966171168
    %v249 = vunpack.c.0.s8 %v248
    %v250 = vlaneseq
    %v251 = vshrl.u32 %v250, 7
    %v252 = vsub.s32 %v249, %v251
    %v253 = vrot.slane %v240, %v252
    %v255 = vunpack.c.l.s4 1966171168
    %v256 = vunpack.c.0.s8 %v255
    %v257 = vlaneseq
    %v258 = vshrl.u32 %v257, 7
    %v259 = vsub.s32 %v256, %v258
    %v260 = vrot.slane %v246, %v259
    %v261 = vcombine.high %v253, %v253
    %v262 = vcombine.high %v260, %v260
    %v264 = vunpack.c.l.s4 1966171168
    %v265 = vunpack.c.0.s8 %v264
    %v266 = vlaneseq
    %v267 = vshrl.u32 %v266, 7
    %v268 = vsub.s32 %v265, %v267
    %v269 = vrot.slane %v253, %v268
    %v271 = vunpack.c.l.s4 1966171168
    %v272 = vunpack.c.0.s8 %v271
    %v273 = vlaneseq
    %v274 = vshrl.u32 %v273, 7
    %v275 = vsub.s32 %v272, %v274
    %v276 = vrot.slane %v260, %v275
    %v278 = vunpack.c.l.s4 1966171168
    %v279 = vunpack.c.0.s8 %v278
    %v280 = vlaneseq
    %v281 = vshrl.u32 %v280, 7
    %v282 = vsub.s32 %v279, %v281
    %v283 = vrot.slane %v261, %v282
    %v285 = vunpack.c.l.s4 1966171168
    %v286 = vunpack.c.0.s8 %v285
    %v287 = vlaneseq
    %v288 = vshrl.u32 %v287, 7
    %v289 = vsub.s32 %v286, %v288
    %v290 = vrot.slane %v262, %v289
    %v291 = vcombine.high %v269, %v269
    %v292 = vcombine.high %v276, %v276
    %v293 = vcombine.high %v283, %v283
    %v294 = vcombine.high %v290, %v290
    %v295 = vlaneseq
    %v296 = vshrl.u32 %v295, 7
    %v297 = vsub.s32 0, %v296
    %v298 = vrot.slane %v269, %v297
    %v299 = vlaneseq
    %v300 = vshrl.u32 %v299, 7
    %v301 = vsub.s32 0, %v300
    %v302 = vrot.slane %v283, %v301
    %v303 = vlaneseq
    %v304 = vshrl.u32 %v303, 7
    %v305 = vsub.s32 0, %v304
    %v306 = vrot.slane %v291, %v305
    %v307 = vlaneseq
    %v308 = vshrl.u32 %v307, 7
    %v309 = vsub.s32 0, %v308
    %v310 = vrot.slane %v293, %v309
    %v311 = vlaneseq
    %v312 = vshrl.u32 %v311, 7
    %v313 = vsub.s32 0, %v312
    %v314 = vrot.slane %v276, %v313
    %v315 = vlaneseq
    %v316 = vshrl.u32 %v315, 7
    %v317 = vsub.s32 0, %v316
    %v318 = vrot.slane %v290, %v317
    %v319 = vlaneseq
    %v320 = vshrl.u32 %v319, 7
    %v321 = vsub.s32 0, %v320
    %v322 = vrot.slane %v292, %v321
    %v323 = vlaneseq
    %v324 = vshrl.u32 %v323, 7
    %v325 = vsub.s32 0, %v324
    %v326 = vrot.slane %v294, %v325
    %v335 = vadd.f32 %v116, %v298
    %v336 = vadd.f32 %v117, %v298
    %v337 = vadd.f32 %v118, %v302
    %v338 = vadd.f32 %v119, %v302
    %v339 = vadd.f32 %v120, %v306
    %v340 = vadd.f32 %v121, %v306
    %v341 = vadd.f32 %v122, %v310
    %v342 = vadd.f32 %v123, %v310
    %v343 = vadd.f32 %v124, %v314
    %v344 = vadd.f32 %v125, %v314
    %v345 = vadd.f32 %v126, %v318
    %v346 = vadd.f32 %v127, %v318
    %v347 = vadd.f32 %v128, %v322
    %v348 = vadd.f32 %v129, %v322
    %v349 = vadd.f32 %v130, %v326
    %v350 = vadd.f32 %v131, %v326
    %v351 = vmax.f32 %v335, 0.0
    %v352 = vmax.f32 %v336, 0.0
    %v353 = vmax.f32 %v337, 0.0
    %v354 = vmax.f32 %v338, 0.0
    %v355 = vmax.f32 %v339, 0.0
    %v356 = vmax.f32 %v340, 0.0
    %v357 = vmax.f32 %v341, 0.0
    %v358 = vmax.f32 %v342, 0.0
    %v359 = vmax.f32 %v343, 0.0
    %v360 = vmax.f32 %v344, 0.0
    %v361 = vmax.f32 %v345, 0.0
    %v362 = vmax.f32 %v346, 0.0
    %v363 = vmax.f32 %v347, 0.0
    %v364 = vmax.f32 %v348, 0.0
    %v365 = vmax.f32 %v349, 0.0
    %v366 = vmax.f32 %v350, 0.0
    %v367 = vld [vmem:[%s5] sm:$0x1]
    %v369 = vlaneseq
    %v370 = vshrl.u32 %v369, 7
    %v371 = vsub.s32 0, %v370
    %v372 = vrot.slane %v367, %v371
    %v374 = vmul.f32 %v351, %v372
    %v375 = vmul.f32 %v352, %v372
    %v376 = vmul.f32 %v353, %v372
    %v377 = vmul.f32 %v354, %v372
    %v378 = vmul.f32 %v355, %v372
    %v379 = vmul.f32 %v356, %v372
    %v380 = vmul.f32 %v357, %v372
    %v381 = vmul.f32 %v358, %v372
    %v382 = vmul.f32 %v359, %v372
    %v383 = vmul.f32 %v360, %v372
    %v384 = vmul.f32 %v361, %v372
    %v385 = vmul.f32 %v362, %v372
    %v386 = vmul.f32 %v363, %v372
    %v387 = vmul.f32 %v364, %v372
    %v388 = vmul.f32 %v365, %v372
    %v389 = vmul.f32 %v366, %v372
    %390 = vadd.xlane.f32.xlu0 %v374
    %v391 = vpop.xlane.xlu0 %390
    %392 = vadd.xlane.f32.xlu0 %v375
    %v393 = vpop.xlane.xlu0 %392
    %394 = vadd.xlane.f32.xlu0 %v376
    %v395 = vpop.xlane.xlu0 %394
    %396 = vadd.xlane.f32.xlu0 %v377
    %v397 = vpop.xlane.xlu0 %396
    %398 = vadd.xlane.f32.xlu0 %v378
    %v399 = vpop.xlane.xlu0 %398
    %400 = vadd.xlane.f32.xlu0 %v379
    %v401 = vpop.xlane.xlu0 %400
    %402 = vadd.xlane.f32.xlu0 %v380
    %v403 = vpop.xlane.xlu0 %402
    %404 = vadd.xlane.f32.xlu0 %v381
    %v405 = vpop.xlane.xlu0 %404
    %406 = vadd.xlane.f32.xlu0 %v382
    %v407 = vpop.xlane.xlu0 %406
    %408 = vadd.xlane.f32.xlu0 %v383
    %v409 = vpop.xlane.xlu0 %408
    %410 = vadd.xlane.f32.xlu0 %v384
    %v411 = vpop.xlane.xlu0 %410
    %412 = vadd.xlane.f32.xlu0 %v385
    %v413 = vpop.xlane.xlu0 %412
    %414 = vadd.xlane.f32.xlu0 %v386
    %v415 = vpop.xlane.xlu0 %414
    %416 = vadd.xlane.f32.xlu0 %v387
    %v417 = vpop.xlane.xlu0 %416
    %418 = vadd.xlane.f32.xlu0 %v388
    %v419 = vpop.xlane.xlu0 %418
    %420 = vadd.xlane.f32.xlu0 %v389
    %v421 = vpop.xlane.xlu0 %420
    %v438 = vlaneseq
    %v439 = vand.u32 %v438, 127
    %v440 = vlaneseq
    %v441 = vshrl.u32 %v440, 7
    %v442 = vsub.s32 %v439, %v441
    %v443 = vrot.slane %v391, %v442
    %v444 = vadd.s32 %v439, 4294967288
    %v445 = vlaneseq
    %v446 = vshrl.u32 %v445, 7
    %v447 = vsub.s32 %v444, %v446
    %v448 = vrot.slane %v393, %v447
    %vm449 = vcmask 130112
    %v450 = vsel %vm449, %v448, %v443
    %v451 = vlaneseq
    %v452 = vshrl.u32 %v451, 7
    %v453 = vsub.s32 %v439, %v452
    %v454 = vrot.slane %v395, %v453
    %v455 = vlaneseq
    %v456 = vshrl.u32 %v455, 7
    %v457 = vsub.s32 %v444, %v456
    %v458 = vrot.slane %v397, %v457
    %v459 = vsel %vm449, %v458, %v454
    %v460 = vlaneseq
    %v461 = vshrl.u32 %v460, 7
    %v462 = vsub.s32 %v439, %v461
    %v463 = vrot.slane %v399, %v462
    %v464 = vlaneseq
    %v465 = vshrl.u32 %v464, 7
    %v466 = vsub.s32 %v444, %v465
    %v467 = vrot.slane %v401, %v466
    %v468 = vsel %vm449, %v467, %v463
    %v469 = vlaneseq
    %v470 = vshrl.u32 %v469, 7
    %v471 = vsub.s32 %v439, %v470
    %v472 = vrot.slane %v403, %v471
    %v473 = vlaneseq
    %v474 = vshrl.u32 %v473, 7
    %v475 = vsub.s32 %v444, %v474
    %v476 = vrot.slane %v405, %v475
    %v477 = vsel %vm449, %v476, %v472
    %v478 = vlaneseq
    %v479 = vshrl.u32 %v478, 7
    %v480 = vsub.s32 %v439, %v479
    %v481 = vrot.slane %v407, %v480
    %v482 = vlaneseq
    %v483 = vshrl.u32 %v482, 7
    %v484 = vsub.s32 %v444, %v483
    %v485 = vrot.slane %v409, %v484
    %v486 = vsel %vm449, %v485, %v481
    %v487 = vlaneseq
    %v488 = vshrl.u32 %v487, 7
    %v489 = vsub.s32 %v439, %v488
    %v490 = vrot.slane %v411, %v489
    %v491 = vlaneseq
    %v492 = vshrl.u32 %v491, 7
    %v493 = vsub.s32 %v444, %v492
    %v494 = vrot.slane %v413, %v493
    %v495 = vsel %vm449, %v494, %v490
    %v496 = vlaneseq
    %v497 = vshrl.u32 %v496, 7
    %v498 = vsub.s32 %v439, %v497
    %v499 = vrot.slane %v415, %v498
    %v500 = vlaneseq
    %v501 = vshrl.u32 %v500, 7
    %v502 = vsub.s32 %v444, %v501
    %v503 = vrot.slane %v417, %v502
    %v504 = vsel %vm449, %v503, %v499
    %v505 = vlaneseq
    %v506 = vshrl.u32 %v505, 7
    %v507 = vsub.s32 %v439, %v506
    %v508 = vrot.slane %v419, %v507
    %v509 = vlaneseq
    %v510 = vshrl.u32 %v509, 7
    %v511 = vsub.s32 %v444, %v510
    %v512 = vrot.slane %v421, %v511
    %v513 = vsel %vm449, %v512, %v508
    %vm514 = vcmask 1041409
    %v515 = vsel %vm514, %v459, %v450
    %vm516 = vcmask 1042434
    %v517 = vsel %vm516, %v468, %v515
    %vm518 = vcmask 1043459
    %v519 = vsel %vm518, %v477, %v517
    %vm520 = vcmask 1044484
    %v521 = vsel %vm520, %v486, %v519
    %vm522 = vcmask 1045509
    %v523 = vsel %vm522, %v495, %v521
    %vm524 = vcmask 1046534
    %v525 = vsel %vm524, %v504, %v523
    %vm526 = vcmask 1047559
    %v527 = vsel %vm526, %v513, %v525
    %vm529 = vcmask 130048
    %v530 = vsel %vm529, %v527, -inf
    %531 = vmax.xlane.f32.xlu0 %v530
    %v532 = vpop.xlane.xlu0 %531
    %v534 = vlaneseq
    %v535 = vshrl.u32 %v534, 7
    %v536 = vsub.s32 0, %v535
    %v537 = vrot.slane %v532, %v536
    %v538 = vlaneseq
    %v539 = vshrl.u32 %v538, 7
    %v540 = vsub.s32 1, %v539
    %v541 = vrot.slane %v532, %v540
    %v542 = vlaneseq
    %v543 = vshrl.u32 %v542, 7
    %v544 = vsub.s32 2, %v543
    %v545 = vrot.slane %v532, %v544
    %v546 = vlaneseq
    %v547 = vshrl.u32 %v546, 7
    %v548 = vsub.s32 3, %v547
    %v549 = vrot.slane %v532, %v548
    %v550 = vlaneseq
    %v551 = vshrl.u32 %v550, 7
    %v552 = vsub.s32 4, %v551
    %v553 = vrot.slane %v532, %v552
    %v554 = vlaneseq
    %v555 = vshrl.u32 %v554, 7
    %v556 = vsub.s32 5, %v555
    %v557 = vrot.slane %v532, %v556
    %v558 = vlaneseq
    %v559 = vshrl.u32 %v558, 7
    %v560 = vsub.s32 6, %v559
    %v561 = vrot.slane %v532, %v560
    %v562 = vlaneseq
    %v563 = vshrl.u32 %v562, 7
    %v564 = vsub.s32 7, %v563
    %v565 = vrot.slane %v532, %v564
    %v574 = vsub.f32 %v391, %v537
    %v575 = vsub.f32 %v393, %v537
    %v576 = vsub.f32 %v395, %v541
    %v577 = vsub.f32 %v397, %v541
    %v578 = vsub.f32 %v399, %v545
    %v579 = vsub.f32 %v401, %v545
    %v580 = vsub.f32 %v403, %v549
    %v581 = vsub.f32 %v405, %v549
    %v582 = vsub.f32 %v407, %v553
    %v583 = vsub.f32 %v409, %v553
    %v584 = vsub.f32 %v411, %v557
    %v585 = vsub.f32 %v413, %v557
    %v586 = vsub.f32 %v415, %v561
    %v587 = vsub.f32 %v417, %v561
    %v588 = vsub.f32 %v419, %v565
    %v589 = vsub.f32 %v421, %v565
    %v590 = vmul.f32 %v574, 1.442695
    %v591 = vpow.pop %v590
    %v592 = vmul.f32 %v575, 1.442695
    %v593 = vpow.pop %v592
    %v594 = vmul.f32 %v576, 1.442695
    %v595 = vpow.pop %v594
    %v596 = vmul.f32 %v577, 1.442695
    %v597 = vpow.pop %v596
    %v598 = vmul.f32 %v578, 1.442695
    %v599 = vpow.pop %v598
    %v600 = vmul.f32 %v579, 1.442695
    %v601 = vpow.pop %v600
    %v602 = vmul.f32 %v580, 1.442695
    %v603 = vpow.pop %v602
    %v604 = vmul.f32 %v581, 1.442695
    %v605 = vpow.pop %v604
    %v606 = vmul.f32 %v582, 1.442695
    %v607 = vpow.pop %v606
    %v608 = vmul.f32 %v583, 1.442695
    %v609 = vpow.pop %v608
    %v610 = vmul.f32 %v584, 1.442695
    %v611 = vpow.pop %v610
    %v612 = vmul.f32 %v585, 1.442695
    %v613 = vpow.pop %v612
    %v614 = vmul.f32 %v586, 1.442695
    %v615 = vpow.pop %v614
    %v616 = vmul.f32 %v587, 1.442695
    %v617 = vpow.pop %v616
    %v618 = vmul.f32 %v588, 1.442695
    %v619 = vpow.pop %v618
    %v620 = vmul.f32 %v589, 1.442695
    %v621 = vpow.pop %v620
    %638 = vset.pattern.permute.xlu0 0
    %639 = vperm.xlu0 %638, %v591
    %v640 = vpop.permute.xlu0 %639
    %641 = vset.pattern.permute.xlu0 0
    %642 = vperm.xlu0 %641, %v593
    %v643 = vpop.permute.xlu0 %642
    %644 = vset.pattern.permute.xlu0 0
    %645 = vperm.xlu0 %644, %v595
    %v646 = vpop.permute.xlu0 %645
    %647 = vset.pattern.permute.xlu0 0
    %648 = vperm.xlu0 %647, %v597
    %v649 = vpop.permute.xlu0 %648
    %650 = vset.pattern.permute.xlu0 0
    %651 = vperm.xlu0 %650, %v599
    %v652 = vpop.permute.xlu0 %651
    %653 = vset.pattern.permute.xlu0 0
    %654 = vperm.xlu0 %653, %v601
    %v655 = vpop.permute.xlu0 %654
    %656 = vset.pattern.permute.xlu0 0
    %657 = vperm.xlu0 %656, %v603
    %v658 = vpop.permute.xlu0 %657
    %659 = vset.pattern.permute.xlu0 0
    %660 = vperm.xlu0 %659, %v605
    %v661 = vpop.permute.xlu0 %660
    %662 = vset.pattern.permute.xlu0 0
    %663 = vperm.xlu0 %662, %v607
    %v664 = vpop.permute.xlu0 %663
    %665 = vset.pattern.permute.xlu0 0
    %666 = vperm.xlu0 %665, %v609
    %v667 = vpop.permute.xlu0 %666
    %668 = vset.pattern.permute.xlu0 0
    %669 = vperm.xlu0 %668, %v611
    %v670 = vpop.permute.xlu0 %669
    %671 = vset.pattern.permute.xlu0 0
    %672 = vperm.xlu0 %671, %v613
    %v673 = vpop.permute.xlu0 %672
    %674 = vset.pattern.permute.xlu0 0
    %675 = vperm.xlu0 %674, %v615
    %v676 = vpop.permute.xlu0 %675
    %677 = vset.pattern.permute.xlu0 0
    %678 = vperm.xlu0 %677, %v617
    %v679 = vpop.permute.xlu0 %678
    %680 = vset.pattern.permute.xlu0 0
    %681 = vperm.xlu0 %680, %v619
    %v682 = vpop.permute.xlu0 %681
    %683 = vset.pattern.permute.xlu0 0
    %684 = vperm.xlu0 %683, %v621
    %v685 = vpop.permute.xlu0 %684
    %v686 = vlaneseq
    %v687 = vshrl.u32 %v686, 7
    %v688 = vsub.s32 %v439, %v687
    %v689 = vrot.slane %v640, %v688
    %v690 = vlaneseq
    %v691 = vshrl.u32 %v690, 7
    %v692 = vsub.s32 %v444, %v691
    %v693 = vrot.slane %v643, %v692
    %v694 = vsel %vm449, %v693, %v689
    %v695 = vlaneseq
    %v696 = vshrl.u32 %v695, 7
    %v697 = vsub.s32 %v439, %v696
    %v698 = vrot.slane %v646, %v697
    %v699 = vlaneseq
    %v700 = vshrl.u32 %v699, 7
    %v701 = vsub.s32 %v444, %v700
    %v702 = vrot.slane %v649, %v701
    %v703 = vsel %vm449, %v702, %v698
    %v704 = vlaneseq
    %v705 = vshrl.u32 %v704, 7
    %v706 = vsub.s32 %v439, %v705
    %v707 = vrot.slane %v652, %v706
    %v708 = vlaneseq
    %v709 = vshrl.u32 %v708, 7
    %v710 = vsub.s32 %v444, %v709
    %v711 = vrot.slane %v655, %v710
    %v712 = vsel %vm449, %v711, %v707
    %v713 = vlaneseq
    %v714 = vshrl.u32 %v713, 7
    %v715 = vsub.s32 %v439, %v714
    %v716 = vrot.slane %v658, %v715
    %v717 = vlaneseq
    %v718 = vshrl.u32 %v717, 7
    %v719 = vsub.s32 %v444, %v718
    %v720 = vrot.slane %v661, %v719
    %v721 = vsel %vm449, %v720, %v716
    %v722 = vlaneseq
    %v723 = vshrl.u32 %v722, 7
    %v724 = vsub.s32 %v439, %v723
    %v725 = vrot.slane %v664, %v724
    %v726 = vlaneseq
    %v727 = vshrl.u32 %v726, 7
    %v728 = vsub.s32 %v444, %v727
    %v729 = vrot.slane %v667, %v728
    %v730 = vsel %vm449, %v729, %v725
    %v731 = vlaneseq
    %v732 = vshrl.u32 %v731, 7
    %v733 = vsub.s32 %v439, %v732
    %v734 = vrot.slane %v670, %v733
    %v735 = vlaneseq
    %v736 = vshrl.u32 %v735, 7
    %v737 = vsub.s32 %v444, %v736
    %v738 = vrot.slane %v673, %v737
    %v739 = vsel %vm449, %v738, %v734
    %v740 = vlaneseq
    %v741 = vshrl.u32 %v740, 7
    %v742 = vsub.s32 %v439, %v741
    %v743 = vrot.slane %v676, %v742
    %v744 = vlaneseq
    %v745 = vshrl.u32 %v744, 7
    %v746 = vsub.s32 %v444, %v745
    %v747 = vrot.slane %v679, %v746
    %v748 = vsel %vm449, %v747, %v743
    %v749 = vlaneseq
    %v750 = vshrl.u32 %v749, 7
    %v751 = vsub.s32 %v439, %v750
    %v752 = vrot.slane %v682, %v751
    %v753 = vlaneseq
    %v754 = vshrl.u32 %v753, 7
    %v755 = vsub.s32 %v444, %v754
    %v756 = vrot.slane %v685, %v755
    %v757 = vsel %vm449, %v756, %v752
    %v758 = vsel %vm514, %v703, %v694
    %v759 = vsel %vm516, %v712, %v758
    %v760 = vsel %vm518, %v721, %v759
    %v761 = vsel %vm520, %v730, %v760
    %v762 = vsel %vm522, %v739, %v761
    %v763 = vsel %vm524, %v748, %v762
    %v764 = vsel %vm526, %v757, %v763
    %v766 = vsel %vm529, %v764, 0.0
    %767 = vadd.xlane.f32.xlu0 %v766
    %v768 = vpop.xlane.xlu0 %767
    %v769 = vrcp.pop %v768
    %v771 = vlaneseq
    %v772 = vshrl.u32 %v771, 7
    %v773 = vsub.s32 0, %v772
    %v774 = vrot.slane %v769, %v773
    %v775 = vlaneseq
    %v776 = vshrl.u32 %v775, 7
    %v777 = vsub.s32 1, %v776
    %v778 = vrot.slane %v769, %v777
    %v779 = vlaneseq
    %v780 = vshrl.u32 %v779, 7
    %v781 = vsub.s32 2, %v780
    %v782 = vrot.slane %v769, %v781
    %v783 = vlaneseq
    %v784 = vshrl.u32 %v783, 7
    %v785 = vsub.s32 3, %v784
    %v786 = vrot.slane %v769, %v785
    %v787 = vlaneseq
    %v788 = vshrl.u32 %v787, 7
    %v789 = vsub.s32 4, %v788
    %v790 = vrot.slane %v769, %v789
    %v791 = vlaneseq
    %v792 = vshrl.u32 %v791, 7
    %v793 = vsub.s32 5, %v792
    %v794 = vrot.slane %v769, %v793
    %v795 = vlaneseq
    %v796 = vshrl.u32 %v795, 7
    %v797 = vsub.s32 6, %v796
    %v798 = vrot.slane %v769, %v797
    %v799 = vlaneseq
    %v800 = vshrl.u32 %v799, 7
    %v801 = vsub.s32 7, %v800
    %v802 = vrot.slane %v769, %v801
    %v811 = vmul.f32 %v591, %v774
    %v812 = vmul.f32 %v593, %v774
    %v813 = vmul.f32 %v595, %v778
    %v814 = vmul.f32 %v597, %v778
    %v815 = vmul.f32 %v599, %v782
    %v816 = vmul.f32 %v601, %v782
    %v817 = vmul.f32 %v603, %v786
    %v818 = vmul.f32 %v605, %v786
    %v819 = vmul.f32 %v607, %v790
    %v820 = vmul.f32 %v609, %v790
    %v821 = vmul.f32 %v611, %v794
    %v822 = vmul.f32 %v613, %v794
    %v823 = vmul.f32 %v615, %v798
    %v824 = vmul.f32 %v617, %v798
    %v825 = vmul.f32 %v619, %v802
    %v826 = vmul.f32 %v621, %v802
    %843 = vset.pattern.permute.xlu0 0
    %844 = vperm.xlu0 %843, %v811
    %v845 = vpop.permute.xlu0 %844
    %846 = vset.pattern.permute.xlu0 0
    %847 = vperm.xlu0 %846, %v812
    %v848 = vpop.permute.xlu0 %847
    %849 = vset.pattern.permute.xlu0 0
    %850 = vperm.xlu0 %849, %v813
    %v851 = vpop.permute.xlu0 %850
    %852 = vset.pattern.permute.xlu0 0
    %853 = vperm.xlu0 %852, %v814
    %v854 = vpop.permute.xlu0 %853
    %855 = vset.pattern.permute.xlu0 0
    %856 = vperm.xlu0 %855, %v815
    %v857 = vpop.permute.xlu0 %856
    %858 = vset.pattern.permute.xlu0 0
    %859 = vperm.xlu0 %858, %v816
    %v860 = vpop.permute.xlu0 %859
    %861 = vset.pattern.permute.xlu0 0
    %862 = vperm.xlu0 %861, %v817
    %v863 = vpop.permute.xlu0 %862
    %864 = vset.pattern.permute.xlu0 0
    %865 = vperm.xlu0 %864, %v818
    %v866 = vpop.permute.xlu0 %865
    %867 = vset.pattern.permute.xlu0 0
    %868 = vperm.xlu0 %867, %v819
    %v869 = vpop.permute.xlu0 %868
    %870 = vset.pattern.permute.xlu0 0
    %871 = vperm.xlu0 %870, %v820
    %v872 = vpop.permute.xlu0 %871
    %873 = vset.pattern.permute.xlu0 0
    %874 = vperm.xlu0 %873, %v821
    %v875 = vpop.permute.xlu0 %874
    %876 = vset.pattern.permute.xlu0 0
    %877 = vperm.xlu0 %876, %v822
    %v878 = vpop.permute.xlu0 %877
    %879 = vset.pattern.permute.xlu0 0
    %880 = vperm.xlu0 %879, %v823
    %v881 = vpop.permute.xlu0 %880
    %882 = vset.pattern.permute.xlu0 0
    %883 = vperm.xlu0 %882, %v824
    %v884 = vpop.permute.xlu0 %883
    %885 = vset.pattern.permute.xlu0 0
    %886 = vperm.xlu0 %885, %v825
    %v887 = vpop.permute.xlu0 %886
    %888 = vset.pattern.permute.xlu0 0
    %889 = vperm.xlu0 %888, %v826
    %v890 = vpop.permute.xlu0 %889
    %v891 = vlaneseq
    %v892 = vshrl.u32 %v891, 7
    %v893 = vsub.s32 %v439, %v892
    %v894 = vrot.slane %v845, %v893
    %v895 = vlaneseq
    %v896 = vshrl.u32 %v895, 7
    %v897 = vsub.s32 %v444, %v896
    %v898 = vrot.slane %v848, %v897
    %v899 = vsel %vm449, %v898, %v894
    %v900 = vlaneseq
    %v901 = vshrl.u32 %v900, 7
    %v902 = vsub.s32 %v439, %v901
    %v903 = vrot.slane %v851, %v902
    %v904 = vlaneseq
    %v905 = vshrl.u32 %v904, 7
    %v906 = vsub.s32 %v444, %v905
    %v907 = vrot.slane %v854, %v906
    %v908 = vsel %vm449, %v907, %v903
    %v909 = vlaneseq
    %v910 = vshrl.u32 %v909, 7
    %v911 = vsub.s32 %v439, %v910
    %v912 = vrot.slane %v857, %v911
    %v913 = vlaneseq
    %v914 = vshrl.u32 %v913, 7
    %v915 = vsub.s32 %v444, %v914
    %v916 = vrot.slane %v860, %v915
    %v917 = vsel %vm449, %v916, %v912
    %v918 = vlaneseq
    %v919 = vshrl.u32 %v918, 7
    %v920 = vsub.s32 %v439, %v919
    %v921 = vrot.slane %v863, %v920
    %v922 = vlaneseq
    %v923 = vshrl.u32 %v922, 7
    %v924 = vsub.s32 %v444, %v923
    %v925 = vrot.slane %v866, %v924
    %v926 = vsel %vm449, %v925, %v921
    %v927 = vlaneseq
    %v928 = vshrl.u32 %v927, 7
    %v929 = vsub.s32 %v439, %v928
    %v930 = vrot.slane %v869, %v929
    %v931 = vlaneseq
    %v932 = vshrl.u32 %v931, 7
    %v933 = vsub.s32 %v444, %v932
    %v934 = vrot.slane %v872, %v933
    %v935 = vsel %vm449, %v934, %v930
    %v936 = vlaneseq
    %v937 = vshrl.u32 %v936, 7
    %v938 = vsub.s32 %v439, %v937
    %v939 = vrot.slane %v875, %v938
    %v940 = vlaneseq
    %v941 = vshrl.u32 %v940, 7
    %v942 = vsub.s32 %v444, %v941
    %v943 = vrot.slane %v878, %v942
    %v944 = vsel %vm449, %v943, %v939
    %v945 = vlaneseq
    %v946 = vshrl.u32 %v945, 7
    %v947 = vsub.s32 %v439, %v946
    %v948 = vrot.slane %v881, %v947
    %v949 = vlaneseq
    %v950 = vshrl.u32 %v949, 7
    %v951 = vsub.s32 %v444, %v950
    %v952 = vrot.slane %v884, %v951
    %v953 = vsel %vm449, %v952, %v948
    %v954 = vlaneseq
    %v955 = vshrl.u32 %v954, 7
    %v956 = vsub.s32 %v439, %v955
    %v957 = vrot.slane %v887, %v956
    %v958 = vlaneseq
    %v959 = vshrl.u32 %v958, 7
    %v960 = vsub.s32 %v444, %v959
    %v961 = vrot.slane %v890, %v960
    %v962 = vsel %vm449, %v961, %v957
    %v963 = vsel %vm514, %v908, %v899
    %v964 = vsel %vm516, %v917, %v963
    %v965 = vsel %vm518, %v926, %v964
    %v966 = vsel %vm520, %v935, %v965
    %v967 = vsel %vm522, %v944, %v966
    %v968 = vsel %vm524, %v953, %v967
    %v969 = vsel %vm526, %v962, %v968
    %971 = vst.msk [vmem:[%s16] sm:$0xff] %vm529, %v969
    %v972 = vpack.c.bf16 %v812, %v811
    %v973 = vpack.c.bf16 %v814, %v813
    %v974 = vpack.c.bf16 %v816, %v815
    %v975 = vpack.c.bf16 %v818, %v817
    %v976 = vpack.c.bf16 %v820, %v819
    %v977 = vpack.c.bf16 %v822, %v821
    %v978 = vpack.c.bf16 %v824, %v823
    %v979 = vpack.c.bf16 %v826, %v825
    %v981 = vunpack.c.l.b16 %v972
    %v982 = vunpack.c.h.b16 %v972
    %983 = vset.pattern.permute.xlu0 0
    %984 = vperm.xlu0 %983, %v981
    %v985 = vpop.permute.xlu0 %984
    %986 = vset.pattern.permute.xlu0 0
    %987 = vperm.xlu0 %986, %v982
    %v988 = vpop.permute.xlu0 %987
    %v989 = vlaneseq
    %v990 = vshrl.u32 %v989, 7
    %v991 = vsub.s32 %v439, %v990
    %v992 = vrot.slane %v985, %v991
    %v993 = vlaneseq
    %v994 = vshrl.u32 %v993, 7
    %v995 = vsub.s32 %v444, %v994
    %v996 = vrot.slane %v988, %v995
    %v997 = vsel %vm449, %v996, %v992
    %v998 = vpack.c.b16 %v997, %v997
    %v1001 = vunpack.c.l.b16 %v100
    %v1002 = vunpack.c.l.b16 %v101
    %v1003 = vpack.c.b16 %v1002, %v1001
    %v1006 = vsel %vm529, %v998, 0
    %1008 = vmatprep.subr.bf16.mxu0 0
    %1009 = vmatpush1.bf16.msra.mxu0 %v1003
    %1010 = vmatprep.subr.bf16.mxu0 0
    %1011 = vmatpush1.bf16.msra.mxu0 0
    %1012 = vmatprep.subr.bf16.mxu0 0
    %1013 = vmatpush1.bf16.msra.mxu0 0
    %1014 = vmatprep.subr.bf16.mxu0 0
    %1015 = vmatpush1.bf16.msra.mxu0 0
    %1016 = vmatprep.subr.bf16.mxu0 0
    %1017 = vmatpush1.bf16.msra.mxu0 0
    %1018 = vmatprep.subr.bf16.mxu0 0
    %1019 = vmatpush1.bf16.msra.mxu0 0
    %1020 = vmatprep.subr.bf16.mxu0 0
    %1021 = vmatpush1.bf16.msra.mxu0 0
    %1022 = vmatprep.subr.bf16.mxu0 0
    %1023 = vmatpush1.bf16.msra.mxu0 0
    %1024 = vmatprep.subr.bf16.mxu0 0
    %1025 = vmatpush1.bf16.msra.mxu0 0
    %1026 = vmatprep.subr.bf16.mxu0 0
    %1027 = vmatpush1.bf16.msra.mxu0 0
    %1028 = vmatprep.subr.bf16.mxu0 0
    %1029 = vmatpush1.bf16.msra.mxu0 0
    %1030 = vmatprep.subr.bf16.mxu0 0
    %1031 = vmatpush1.bf16.msra.mxu0 0
    %1032 = vmatprep.subr.bf16.mxu0 0
    %1033 = vmatpush1.bf16.msra.mxu0 0
    %1034 = vmatprep.subr.bf16.mxu0 0
    %1035 = vmatpush1.bf16.msra.mxu0 0
    %1036 = vmatprep.subr.bf16.mxu0 0
    %1037 = vmatpush1.bf16.msra.mxu0 0
    %1038 = vmatprep.subr.bf16.mxu0 0
    %1039 = vmatpush1.bf16.msra.mxu0 0
    %1040 = vmatprep.mubr.bf16.mxu0 0
    %1041 = vmatmul.mubr.bf16.gmra.mrb[0].mxu0 %v1006
    %v1042 = vpop.f32.mrb[0].mxu0
    %v1043 = vadd.f32 0.0, %v1042
    %v1044 = vpop.f32.mrb[0].mxu0
    %v1045 = vpop.f32.mrb[0].mxu0
    %v1046 = vpop.f32.mrb[0].mxu0
    %1047 = vdwg.mxu0
    %v1049 = vunpack.c.l.b16 %v973
    %v1050 = vunpack.c.h.b16 %v973
    %1051 = vset.pattern.permute.xlu0 0
    %1052 = vperm.xlu0 %1051, %v1049
    %v1053 = vpop.permute.xlu0 %1052
    %1054 = vset.pattern.permute.xlu0 0
    %1055 = vperm.xlu0 %1054, %v1050
    %v1056 = vpop.permute.xlu0 %1055
    %v1057 = vlaneseq
    %v1058 = vshrl.u32 %v1057, 7
    %v1059 = vsub.s32 %v439, %v1058
    %v1060 = vrot.slane %v1053, %v1059
    %v1061 = vlaneseq
    %v1062 = vshrl.u32 %v1061, 7
    %v1063 = vsub.s32 %v444, %v1062
    %v1064 = vrot.slane %v1056, %v1063
    %v1065 = vsel %vm449, %v1064, %v1060
    %v1066 = vpack.c.b16 %v1065, %v1065
    %v1069 = vunpack.c.l.b16 %v102
    %v1070 = vunpack.c.l.b16 %v103
    %v1071 = vpack.c.b16 %v1070, %v1069
    %v1074 = vsel %vm529, %v1066, 0
    %1076 = vmatprep.subr.bf16.mxu0 0
    %1077 = vmatpush1.bf16.msra.mxu0 %v1071
    %1078 = vmatprep.subr.bf16.mxu0 0
    %1079 = vmatpush1.bf16.msra.mxu0 0
    %1080 = vmatprep.subr.bf16.mxu0 0
    %1081 = vmatpush1.bf16.msra.mxu0 0
    %1082 = vmatprep.subr.bf16.mxu0 0
    %1083 = vmatpush1.bf16.msra.mxu0 0
    %1084 = vmatprep.subr.bf16.mxu0 0
    %1085 = vmatpush1.bf16.msra.mxu0 0
    %1086 = vmatprep.subr.bf16.mxu0 0
    %1087 = vmatpush1.bf16.msra.mxu0 0
    %1088 = vmatprep.subr.bf16.mxu0 0
    %1089 = vmatpush1.bf16.msra.mxu0 0
    %1090 = vmatprep.subr.bf16.mxu0 0
    %1091 = vmatpush1.bf16.msra.mxu0 0
    %1092 = vmatprep.subr.bf16.mxu0 0
    %1093 = vmatpush1.bf16.msra.mxu0 0
    %1094 = vmatprep.subr.bf16.mxu0 0
    %1095 = vmatpush1.bf16.msra.mxu0 0
    %1096 = vmatprep.subr.bf16.mxu0 0
    %1097 = vmatpush1.bf16.msra.mxu0 0
    %1098 = vmatprep.subr.bf16.mxu0 0
    %1099 = vmatpush1.bf16.msra.mxu0 0
    %1100 = vmatprep.subr.bf16.mxu0 0
    %1101 = vmatpush1.bf16.msra.mxu0 0
    %1102 = vmatprep.subr.bf16.mxu0 0
    %1103 = vmatpush1.bf16.msra.mxu0 0
    %1104 = vmatprep.subr.bf16.mxu0 0
    %1105 = vmatpush1.bf16.msra.mxu0 0
    %1106 = vmatprep.subr.bf16.mxu0 0
    %1107 = vmatpush1.bf16.msra.mxu0 0
    %1108 = vmatprep.mubr.bf16.mxu0 0
    %1109 = vmatmul.mubr.bf16.gmra.mrb[0].mxu0 %v1074
    %v1110 = vpop.f32.mrb[0].mxu0
    %v1111 = vadd.f32 0.0, %v1110
    %v1112 = vpop.f32.mrb[0].mxu0
    %v1113 = vpop.f32.mrb[0].mxu0
    %v1114 = vpop.f32.mrb[0].mxu0
    %1115 = vdwg.mxu0
    %v1117 = vunpack.c.l.b16 %v974
    %v1118 = vunpack.c.h.b16 %v974
    %1119 = vset.pattern.permute.xlu0 0
    %1120 = vperm.xlu0 %1119, %v1117
    %v1121 = vpop.permute.xlu0 %1120
    %1122 = vset.pattern.permute.xlu0 0
    %1123 = vperm.xlu0 %1122, %v1118
    %v1124 = vpop.permute.xlu0 %1123
    %v1125 = vlaneseq
    %v1126 = vshrl.u32 %v1125, 7
    %v1127 = vsub.s32 %v439, %v1126
    %v1128 = vrot.slane %v1121, %v1127
    %v1129 = vlaneseq
    %v1130 = vshrl.u32 %v1129, 7
    %v1131 = vsub.s32 %v444, %v1130
    %v1132 = vrot.slane %v1124, %v1131
    %v1133 = vsel %vm449, %v1132, %v1128
    %v1134 = vpack.c.b16 %v1133, %v1133
    %v1137 = vunpack.c.l.b16 %v104
    %v1138 = vunpack.c.l.b16 %v105
    %v1139 = vpack.c.b16 %v1138, %v1137
    %v1142 = vsel %vm529, %v1134, 0
    %1144 = vmatprep.subr.bf16.mxu0 0
    %1145 = vmatpush1.bf16.msra.mxu0 %v1139
    %1146 = vmatprep.subr.bf16.mxu0 0
    %1147 = vmatpush1.bf16.msra.mxu0 0
    %1148 = vmatprep.subr.bf16.mxu0 0
    %1149 = vmatpush1.bf16.msra.mxu0 0
    %1150 = vmatprep.subr.bf16.mxu0 0
    %1151 = vmatpush1.bf16.msra.mxu0 0
    %1152 = vmatprep.subr.bf16.mxu0 0
    %1153 = vmatpush1.bf16.msra.mxu0 0
    %1154 = vmatprep.subr.bf16.mxu0 0
    %1155 = vmatpush1.bf16.msra.mxu0 0
    %1156 = vmatprep.subr.bf16.mxu0 0
    %1157 = vmatpush1.bf16.msra.mxu0 0
    %1158 = vmatprep.subr.bf16.mxu0 0
    %1159 = vmatpush1.bf16.msra.mxu0 0
    %1160 = vmatprep.subr.bf16.mxu0 0
    %1161 = vmatpush1.bf16.msra.mxu0 0
    %1162 = vmatprep.subr.bf16.mxu0 0
    %1163 = vmatpush1.bf16.msra.mxu0 0
    %1164 = vmatprep.subr.bf16.mxu0 0
    %1165 = vmatpush1.bf16.msra.mxu0 0
    %1166 = vmatprep.subr.bf16.mxu0 0
    %1167 = vmatpush1.bf16.msra.mxu0 0
    %1168 = vmatprep.subr.bf16.mxu0 0
    %1169 = vmatpush1.bf16.msra.mxu0 0
    %1170 = vmatprep.subr.bf16.mxu0 0
    %1171 = vmatpush1.bf16.msra.mxu0 0
    %1172 = vmatprep.subr.bf16.mxu0 0
    %1173 = vmatpush1.bf16.msra.mxu0 0
    %1174 = vmatprep.subr.bf16.mxu0 0
    %1175 = vmatpush1.bf16.msra.mxu0 0
    %1176 = vmatprep.mubr.bf16.mxu0 0
    %1177 = vmatmul.mubr.bf16.gmra.mrb[0].mxu0 %v1142
    %v1178 = vpop.f32.mrb[0].mxu0
    %v1179 = vadd.f32 0.0, %v1178
    %v1180 = vpop.f32.mrb[0].mxu0
    %v1181 = vpop.f32.mrb[0].mxu0
    %v1182 = vpop.f32.mrb[0].mxu0
    %1183 = vdwg.mxu0
    %v1185 = vunpack.c.l.b16 %v975
    %v1186 = vunpack.c.h.b16 %v975
    %1187 = vset.pattern.permute.xlu0 0
    %1188 = vperm.xlu0 %1187, %v1185
    %v1189 = vpop.permute.xlu0 %1188
    %1190 = vset.pattern.permute.xlu0 0
    %1191 = vperm.xlu0 %1190, %v1186
    %v1192 = vpop.permute.xlu0 %1191
    %v1193 = vlaneseq
    %v1194 = vshrl.u32 %v1193, 7
    %v1195 = vsub.s32 %v439, %v1194
    %v1196 = vrot.slane %v1189, %v1195
    %v1197 = vlaneseq
    %v1198 = vshrl.u32 %v1197, 7
    %v1199 = vsub.s32 %v444, %v1198
    %v1200 = vrot.slane %v1192, %v1199
    %v1201 = vsel %vm449, %v1200, %v1196
    %v1202 = vpack.c.b16 %v1201, %v1201
    %v1205 = vunpack.c.l.b16 %v106
    %v1206 = vunpack.c.l.b16 %v107
    %v1207 = vpack.c.b16 %v1206, %v1205
    %v1210 = vsel %vm529, %v1202, 0
    %1212 = vmatprep.subr.bf16.mxu0 0
    %1213 = vmatpush1.bf16.msra.mxu0 %v1207
    %1214 = vmatprep.subr.bf16.mxu0 0
    %1215 = vmatpush1.bf16.msra.mxu0 0
    %1216 = vmatprep.subr.bf16.mxu0 0
    %1217 = vmatpush1.bf16.msra.mxu0 0
    %1218 = vmatprep.subr.bf16.mxu0 0
    %1219 = vmatpush1.bf16.msra.mxu0 0
    %1220 = vmatprep.subr.bf16.mxu0 0
    %1221 = vmatpush1.bf16.msra.mxu0 0
    %1222 = vmatprep.subr.bf16.mxu0 0
    %1223 = vmatpush1.bf16.msra.mxu0 0
    %1224 = vmatprep.subr.bf16.mxu0 0
    %1225 = vmatpush1.bf16.msra.mxu0 0
    %1226 = vmatprep.subr.bf16.mxu0 0
    %1227 = vmatpush1.bf16.msra.mxu0 0
    %1228 = vmatprep.subr.bf16.mxu0 0
    %1229 = vmatpush1.bf16.msra.mxu0 0
    %1230 = vmatprep.subr.bf16.mxu0 0
    %1231 = vmatpush1.bf16.msra.mxu0 0
    %1232 = vmatprep.subr.bf16.mxu0 0
    %1233 = vmatpush1.bf16.msra.mxu0 0
    %1234 = vmatprep.subr.bf16.mxu0 0
    %1235 = vmatpush1.bf16.msra.mxu0 0
    %1236 = vmatprep.subr.bf16.mxu0 0
    %1237 = vmatpush1.bf16.msra.mxu0 0
    %1238 = vmatprep.subr.bf16.mxu0 0
    %1239 = vmatpush1.bf16.msra.mxu0 0
    %1240 = vmatprep.subr.bf16.mxu0 0
    %1241 = vmatpush1.bf16.msra.mxu0 0
    %1242 = vmatprep.subr.bf16.mxu0 0
    %1243 = vmatpush1.bf16.msra.mxu0 0
    %1244 = vmatprep.mubr.bf16.mxu0 0
    %1245 = vmatmul.mubr.bf16.gmra.mrb[0].mxu0 %v1210
    %v1246 = vpop.f32.mrb[0].mxu0
    %v1247 = vadd.f32 0.0, %v1246
    %v1248 = vpop.f32.mrb[0].mxu0
    %v1249 = vpop.f32.mrb[0].mxu0
    %v1250 = vpop.f32.mrb[0].mxu0
    %1251 = vdwg.mxu0
    %v1253 = vunpack.c.l.b16 %v976
    %v1254 = vunpack.c.h.b16 %v976
    %1255 = vset.pattern.permute.xlu0 0
    %1256 = vperm.xlu0 %1255, %v1253
    %v1257 = vpop.permute.xlu0 %1256
    %1258 = vset.pattern.permute.xlu0 0
    %1259 = vperm.xlu0 %1258, %v1254
    %v1260 = vpop.permute.xlu0 %1259
    %v1261 = vlaneseq
    %v1262 = vshrl.u32 %v1261, 7
    %v1263 = vsub.s32 %v439, %v1262
    %v1264 = vrot.slane %v1257, %v1263
    %v1265 = vlaneseq
    %v1266 = vshrl.u32 %v1265, 7
    %v1267 = vsub.s32 %v444, %v1266
    %v1268 = vrot.slane %v1260, %v1267
    %v1269 = vsel %vm449, %v1268, %v1264
    %v1270 = vpack.c.b16 %v1269, %v1269
    %v1273 = vunpack.c.l.b16 %v108
    %v1274 = vunpack.c.l.b16 %v109
    %v1275 = vpack.c.b16 %v1274, %v1273
    %v1278 = vsel %vm529, %v1270, 0
    %1280 = vmatprep.subr.bf16.mxu0 0
    %1281 = vmatpush1.bf16.msra.mxu0 %v1275
    %1282 = vmatprep.subr.bf16.mxu0 0
    %1283 = vmatpush1.bf16.msra.mxu0 0
    %1284 = vmatprep.subr.bf16.mxu0 0
    %1285 = vmatpush1.bf16.msra.mxu0 0
    %1286 = vmatprep.subr.bf16.mxu0 0
    %1287 = vmatpush1.bf16.msra.mxu0 0
    %1288 = vmatprep.subr.bf16.mxu0 0
    %1289 = vmatpush1.bf16.msra.mxu0 0
    %1290 = vmatprep.subr.bf16.mxu0 0
    %1291 = vmatpush1.bf16.msra.mxu0 0
    %1292 = vmatprep.subr.bf16.mxu0 0
    %1293 = vmatpush1.bf16.msra.mxu0 0
    %1294 = vmatprep.subr.bf16.mxu0 0
    %1295 = vmatpush1.bf16.msra.mxu0 0
    %1296 = vmatprep.subr.bf16.mxu0 0
    %1297 = vmatpush1.bf16.msra.mxu0 0
    %1298 = vmatprep.subr.bf16.mxu0 0
    %1299 = vmatpush1.bf16.msra.mxu0 0
    %1300 = vmatprep.subr.bf16.mxu0 0
    %1301 = vmatpush1.bf16.msra.mxu0 0
    %1302 = vmatprep.subr.bf16.mxu0 0
    %1303 = vmatpush1.bf16.msra.mxu0 0
    %1304 = vmatprep.subr.bf16.mxu0 0
    %1305 = vmatpush1.bf16.msra.mxu0 0
    %1306 = vmatprep.subr.bf16.mxu0 0
    %1307 = vmatpush1.bf16.msra.mxu0 0
    %1308 = vmatprep.subr.bf16.mxu0 0
    %1309 = vmatpush1.bf16.msra.mxu0 0
    %1310 = vmatprep.subr.bf16.mxu0 0
    %1311 = vmatpush1.bf16.msra.mxu0 0
    %1312 = vmatprep.mubr.bf16.mxu0 0
    %1313 = vmatmul.mubr.bf16.gmra.mrb[0].mxu0 %v1278
    %v1314 = vpop.f32.mrb[0].mxu0
    %v1315 = vadd.f32 0.0, %v1314
    %v1316 = vpop.f32.mrb[0].mxu0
    %v1317 = vpop.f32.mrb[0].mxu0
    %v1318 = vpop.f32.mrb[0].mxu0
    %1319 = vdwg.mxu0
    %v1321 = vunpack.c.l.b16 %v977
    %v1322 = vunpack.c.h.b16 %v977
    %1323 = vset.pattern.permute.xlu0 0
    %1324 = vperm.xlu0 %1323, %v1321
    %v1325 = vpop.permute.xlu0 %1324
    %1326 = vset.pattern.permute.xlu0 0
    %1327 = vperm.xlu0 %1326, %v1322
    %v1328 = vpop.permute.xlu0 %1327
    %v1329 = vlaneseq
    %v1330 = vshrl.u32 %v1329, 7
    %v1331 = vsub.s32 %v439, %v1330
    %v1332 = vrot.slane %v1325, %v1331
    %v1333 = vlaneseq
    %v1334 = vshrl.u32 %v1333, 7
    %v1335 = vsub.s32 %v444, %v1334
    %v1336 = vrot.slane %v1328, %v1335
    %v1337 = vsel %vm449, %v1336, %v1332
    %v1338 = vpack.c.b16 %v1337, %v1337
    %v1341 = vunpack.c.l.b16 %v110
    %v1342 = vunpack.c.l.b16 %v111
    %v1343 = vpack.c.b16 %v1342, %v1341
    %v1346 = vsel %vm529, %v1338, 0
    %1348 = vmatprep.subr.bf16.mxu0 0
    %1349 = vmatpush1.bf16.msra.mxu0 %v1343
    %1350 = vmatprep.subr.bf16.mxu0 0
    %1351 = vmatpush1.bf16.msra.mxu0 0
    %1352 = vmatprep.subr.bf16.mxu0 0
    %1353 = vmatpush1.bf16.msra.mxu0 0
    %1354 = vmatprep.subr.bf16.mxu0 0
    %1355 = vmatpush1.bf16.msra.mxu0 0
    %1356 = vmatprep.subr.bf16.mxu0 0
    %1357 = vmatpush1.bf16.msra.mxu0 0
    %1358 = vmatprep.subr.bf16.mxu0 0
    %1359 = vmatpush1.bf16.msra.mxu0 0
    %1360 = vmatprep.subr.bf16.mxu0 0
    %1361 = vmatpush1.bf16.msra.mxu0 0
    %1362 = vmatprep.subr.bf16.mxu0 0
    %1363 = vmatpush1.bf16.msra.mxu0 0
    %1364 = vmatprep.subr.bf16.mxu0 0
    %1365 = vmatpush1.bf16.msra.mxu0 0
    %1366 = vmatprep.subr.bf16.mxu0 0
    %1367 = vmatpush1.bf16.msra.mxu0 0
    %1368 = vmatprep.subr.bf16.mxu0 0
    %1369 = vmatpush1.bf16.msra.mxu0 0
    %1370 = vmatprep.subr.bf16.mxu0 0
    %1371 = vmatpush1.bf16.msra.mxu0 0
    %1372 = vmatprep.subr.bf16.mxu0 0
    %1373 = vmatpush1.bf16.msra.mxu0 0
    %1374 = vmatprep.subr.bf16.mxu0 0
    %1375 = vmatpush1.bf16.msra.mxu0 0
    %1376 = vmatprep.subr.bf16.mxu0 0
    %1377 = vmatpush1.bf16.msra.mxu0 0
    %1378 = vmatprep.subr.bf16.mxu0 0
    %1379 = vmatpush1.bf16.msra.mxu0 0
    %1380 = vmatprep.mubr.bf16.mxu0 0
    %1381 = vmatmul.mubr.bf16.gmra.mrb[0].mxu0 %v1346
    %v1382 = vpop.f32.mrb[0].mxu0
    %v1383 = vadd.f32 0.0, %v1382
    %v1384 = vpop.f32.mrb[0].mxu0
    %v1385 = vpop.f32.mrb[0].mxu0
    %v1386 = vpop.f32.mrb[0].mxu0
    %1387 = vdwg.mxu0
    %v1389 = vunpack.c.l.b16 %v978
    %v1390 = vunpack.c.h.b16 %v978
    %1391 = vset.pattern.permute.xlu0 0
    %1392 = vperm.xlu0 %1391, %v1389
    %v1393 = vpop.permute.xlu0 %1392
    %1394 = vset.pattern.permute.xlu0 0
    %1395 = vperm.xlu0 %1394, %v1390
    %v1396 = vpop.permute.xlu0 %1395
    %v1397 = vlaneseq
    %v1398 = vshrl.u32 %v1397, 7
    %v1399 = vsub.s32 %v439, %v1398
    %v1400 = vrot.slane %v1393, %v1399
    %v1401 = vlaneseq
    %v1402 = vshrl.u32 %v1401, 7
    %v1403 = vsub.s32 %v444, %v1402
    %v1404 = vrot.slane %v1396, %v1403
    %v1405 = vsel %vm449, %v1404, %v1400
    %v1406 = vpack.c.b16 %v1405, %v1405
    %v1409 = vunpack.c.l.b16 %v112
    %v1410 = vunpack.c.l.b16 %v113
    %v1411 = vpack.c.b16 %v1410, %v1409
    %v1414 = vsel %vm529, %v1406, 0
    %1416 = vmatprep.subr.bf16.mxu0 0
    %1417 = vmatpush1.bf16.msra.mxu0 %v1411
    %1418 = vmatprep.subr.bf16.mxu0 0
    %1419 = vmatpush1.bf16.msra.mxu0 0
    %1420 = vmatprep.subr.bf16.mxu0 0
    %1421 = vmatpush1.bf16.msra.mxu0 0
    %1422 = vmatprep.subr.bf16.mxu0 0
    %1423 = vmatpush1.bf16.msra.mxu0 0
    %1424 = vmatprep.subr.bf16.mxu0 0
    %1425 = vmatpush1.bf16.msra.mxu0 0
    %1426 = vmatprep.subr.bf16.mxu0 0
    %1427 = vmatpush1.bf16.msra.mxu0 0
    %1428 = vmatprep.subr.bf16.mxu0 0
    %1429 = vmatpush1.bf16.msra.mxu0 0
    %1430 = vmatprep.subr.bf16.mxu0 0
    %1431 = vmatpush1.bf16.msra.mxu0 0
    %1432 = vmatprep.subr.bf16.mxu0 0
    %1433 = vmatpush1.bf16.msra.mxu0 0
    %1434 = vmatprep.subr.bf16.mxu0 0
    %1435 = vmatpush1.bf16.msra.mxu0 0
    %1436 = vmatprep.subr.bf16.mxu0 0
    %1437 = vmatpush1.bf16.msra.mxu0 0
    %1438 = vmatprep.subr.bf16.mxu0 0
    %1439 = vmatpush1.bf16.msra.mxu0 0
    %1440 = vmatprep.subr.bf16.mxu0 0
    %1441 = vmatpush1.bf16.msra.mxu0 0
    %1442 = vmatprep.subr.bf16.mxu0 0
    %1443 = vmatpush1.bf16.msra.mxu0 0
    %1444 = vmatprep.subr.bf16.mxu0 0
    %1445 = vmatpush1.bf16.msra.mxu0 0
    %1446 = vmatprep.subr.bf16.mxu0 0
    %1447 = vmatpush1.bf16.msra.mxu0 0
    %1448 = vmatprep.mubr.bf16.mxu0 0
    %1449 = vmatmul.mubr.bf16.gmra.mrb[0].mxu0 %v1414
    %v1450 = vpop.f32.mrb[0].mxu0
    %v1451 = vadd.f32 0.0, %v1450
    %v1452 = vpop.f32.mrb[0].mxu0
    %v1453 = vpop.f32.mrb[0].mxu0
    %v1454 = vpop.f32.mrb[0].mxu0
    %1455 = vdwg.mxu0
    %v1457 = vunpack.c.l.b16 %v979
    %v1458 = vunpack.c.h.b16 %v979
    %1459 = vset.pattern.permute.xlu0 0
    %1460 = vperm.xlu0 %1459, %v1457
    %v1461 = vpop.permute.xlu0 %1460
    %1462 = vset.pattern.permute.xlu0 0
    %1463 = vperm.xlu0 %1462, %v1458
    %v1464 = vpop.permute.xlu0 %1463
    %v1465 = vlaneseq
    %v1466 = vshrl.u32 %v1465, 7
    %v1467 = vsub.s32 %v439, %v1466
    %v1468 = vrot.slane %v1461, %v1467
    %v1469 = vlaneseq
    %v1470 = vshrl.u32 %v1469, 7
    %v1471 = vsub.s32 %v444, %v1470
    %v1472 = vrot.slane %v1464, %v1471
    %v1473 = vsel %vm449, %v1472, %v1468
    %v1474 = vpack.c.b16 %v1473, %v1473
    %v1477 = vunpack.c.l.b16 %v114
    %v1478 = vunpack.c.l.b16 %v115
    %v1479 = vpack.c.b16 %v1478, %v1477
    %v1482 = vsel %vm529, %v1474, 0
    %1484 = vmatprep.subr.bf16.mxu0 0
    %1485 = vmatpush1.bf16.msra.mxu0 %v1479
    %1486 = vmatprep.subr.bf16.mxu0 0
    %1487 = vmatpush1.bf16.msra.mxu0 0
    %1488 = vmatprep.subr.bf16.mxu0 0
    %1489 = vmatpush1.bf16.msra.mxu0 0
    %1490 = vmatprep.subr.bf16.mxu0 0
    %1491 = vmatpush1.bf16.msra.mxu0 0
    %1492 = vmatprep.subr.bf16.mxu0 0
    %1493 = vmatpush1.bf16.msra.mxu0 0
    %1494 = vmatprep.subr.bf16.mxu0 0
    %1495 = vmatpush1.bf16.msra.mxu0 0
    %1496 = vmatprep.subr.bf16.mxu0 0
    %1497 = vmatpush1.bf16.msra.mxu0 0
    %1498 = vmatprep.subr.bf16.mxu0 0
    %1499 = vmatpush1.bf16.msra.mxu0 0
    %1500 = vmatprep.subr.bf16.mxu0 0
    %1501 = vmatpush1.bf16.msra.mxu0 0
    %1502 = vmatprep.subr.bf16.mxu0 0
    %1503 = vmatpush1.bf16.msra.mxu0 0
    %1504 = vmatprep.subr.bf16.mxu0 0
    %1505 = vmatpush1.bf16.msra.mxu0 0
    %1506 = vmatprep.subr.bf16.mxu0 0
    %1507 = vmatpush1.bf16.msra.mxu0 0
    %1508 = vmatprep.subr.bf16.mxu0 0
    %1509 = vmatpush1.bf16.msra.mxu0 0
    %1510 = vmatprep.subr.bf16.mxu0 0
    %1511 = vmatpush1.bf16.msra.mxu0 0
    %1512 = vmatprep.subr.bf16.mxu0 0
    %1513 = vmatpush1.bf16.msra.mxu0 0
    %1514 = vmatprep.subr.bf16.mxu0 0
    %1515 = vmatpush1.bf16.msra.mxu0 0
    %1516 = vmatprep.mubr.bf16.mxu0 0
    %1517 = vmatmul.mubr.bf16.gmra.mrb[0].mxu0 %v1482
    %v1518 = vpop.f32.mrb[0].mxu0
    %v1519 = vadd.f32 0.0, %v1518
    %v1520 = vpop.f32.mrb[0].mxu0
    %v1521 = vpop.f32.mrb[0].mxu0
    %v1522 = vpop.f32.mrb[0].mxu0
    %1523 = vdwg.mxu0
    %v1524 = vld [vmem:[%s9] sm:$0xff]
    %v1525 = vld [vmem:[%s10] sm:$0xff]
    %v1526 = vpack.c.bf16 %v1043, %v1043
    %v1527 = vpack.c.bf16 %v1111, %v1111
    %v1528 = vpack.c.bf16 %v1179, %v1179
    %v1529 = vpack.c.bf16 %v1247, %v1247
    %v1530 = vpack.c.bf16 %v1315, %v1315
    %v1531 = vpack.c.bf16 %v1383, %v1383
    %v1532 = vpack.c.bf16 %v1451, %v1451
    %v1533 = vpack.c.bf16 %v1519, %v1519
    %v1534 = vld [vmem:[%s6] sm:$0xff]
    %v1535 = vld [vmem:[%s6 + $0x8] sm:$0xff]
    %v1536 = vld [vmem:[%s6 + $0x10] sm:$0xff]
    %v1537 = vld [vmem:[%s6 + $0x18] sm:$0xff]
    %v1538 = vld [vmem:[%s6 + $0x20] sm:$0xff]
    %v1539 = vld [vmem:[%s6 + $0x28] sm:$0xff]
    %v1540 = vld [vmem:[%s6 + $0x30] sm:$0xff]
    %v1541 = vld [vmem:[%s6 + $0x38] sm:$0xff]
    %v1542 = vld [vmem:[%s6 + $0x40] sm:$0xff]
    %v1543 = vld [vmem:[%s6 + $0x48] sm:$0xff]
    %v1544 = vld [vmem:[%s6 + $0x50] sm:$0xff]
    %v1545 = vld [vmem:[%s6 + $0x58] sm:$0xff]
    %v1546 = vld [vmem:[%s6 + $0x60] sm:$0xff]
    %v1547 = vld [vmem:[%s6 + $0x68] sm:$0xff]
    %v1548 = vld [vmem:[%s6 + $0x70] sm:$0xff]
    %v1549 = vld [vmem:[%s6 + $0x78] sm:$0xff]
    %v1550 = vld [vmem:[%s6 + $0x80] sm:$0xff]
    %v1551 = vld [vmem:[%s6 + $0x88] sm:$0xff]
    %v1552 = vld [vmem:[%s6 + $0x90] sm:$0xff]
    %v1553 = vld [vmem:[%s6 + $0x98] sm:$0xff]
    %v1554 = vld [vmem:[%s6 + $0xa0] sm:$0xff]
    %v1555 = vld [vmem:[%s6 + $0xa8] sm:$0xff]
    %v1556 = vld [vmem:[%s6 + $0xb0] sm:$0xff]
    %v1557 = vld [vmem:[%s6 + $0xb8] sm:$0xff]
    %v1558 = vld [vmem:[%s6 + $0xc0] sm:$0xff]
    %v1559 = vld [vmem:[%s6 + $0xc8] sm:$0xff]
    %v1560 = vld [vmem:[%s6 + $0xd0] sm:$0xff]
    %v1561 = vld [vmem:[%s6 + $0xd8] sm:$0xff]
    %v1562 = vld [vmem:[%s6 + $0xe0] sm:$0xff]
    %v1563 = vld [vmem:[%s6 + $0xe8] sm:$0xff]
    %v1564 = vld [vmem:[%s6 + $0xf0] sm:$0xff]
    %v1565 = vld [vmem:[%s6 + $0xf8] sm:$0xff]
    %v1566 = vpack.c.bf16 %v1524, %v1524
    %v1567 = vld [vmem:[#allocation2] sm:$0xff]
    %v1568 = vld [vmem:[#allocation2 + $0x8] sm:$0xff]
    %v1569 = vld [vmem:[#allocation2 + $0x10] sm:$0xff]
    %v1570 = vld [vmem:[#allocation2 + $0x18] sm:$0xff]
    %v1571 = vld [vmem:[#allocation2 + $0x20] sm:$0xff]
    %v1572 = vld [vmem:[#allocation2 + $0x28] sm:$0xff]
    %v1573 = vld [vmem:[#allocation2 + $0x30] sm:$0xff]
    %v1574 = vld [vmem:[#allocation2 + $0x38] sm:$0xff]
    %v1575 = vld [vmem:[#allocation2 + $0x40] sm:$0xff]
    %v1576 = vld [vmem:[#allocation2 + $0x48] sm:$0xff]
    %v1577 = vld [vmem:[#allocation2 + $0x50] sm:$0xff]
    %v1578 = vld [vmem:[#allocation2 + $0x58] sm:$0xff]
    %v1579 = vld [vmem:[#allocation2 + $0x60] sm:$0xff]
    %v1580 = vld [vmem:[#allocation2 + $0x68] sm:$0xff]
    %v1581 = vld [vmem:[#allocation2 + $0x70] sm:$0xff]
    %v1582 = vld [vmem:[#allocation2 + $0x78] sm:$0xff]
    %v1583 = vld [vmem:[#allocation2 + $0x80] sm:$0xff]
    %v1584 = vld [vmem:[#allocation2 + $0x88] sm:$0xff]
    %v1585 = vld [vmem:[#allocation2 + $0x90] sm:$0xff]
    %v1586 = vld [vmem:[#allocation2 + $0x98] sm:$0xff]
    %v1587 = vld [vmem:[#allocation2 + $0xa0] sm:$0xff]
    %v1588 = vld [vmem:[#allocation2 + $0xa8] sm:$0xff]
    %v1589 = vld [vmem:[#allocation2 + $0xb0] sm:$0xff]
    %v1590 = vld [vmem:[#allocation2 + $0xb8] sm:$0xff]
    %v1591 = vld [vmem:[#allocation2 + $0xc0] sm:$0xff]
    %v1592 = vld [vmem:[#allocation2 + $0xc8] sm:$0xff]
    %v1593 = vld [vmem:[#allocation2 + $0xd0] sm:$0xff]
    %v1594 = vld [vmem:[#allocation2 + $0xd8] sm:$0xff]
    %v1595 = vld [vmem:[#allocation2 + $0xe0] sm:$0xff]
    %v1596 = vld [vmem:[#allocation2 + $0xe8] sm:$0xff]
    %v1597 = vld [vmem:[#allocation2 + $0xf0] sm:$0xff]
    %v1598 = vld [vmem:[#allocation2 + $0xf8] sm:$0xff]
    %v1631 = vunpack.c.l.b16 %v1567
    %v1632 = vunpack.c.h.b16 %v1567
    %v1633 = vunpack.c.l.b16 %v1568
    %v1634 = vunpack.c.h.b16 %v1568
    %v1635 = vunpack.c.l.b16 %v1569
    %v1636 = vunpack.c.h.b16 %v1569
    %v1637 = vunpack.c.l.b16 %v1570
    %v1638 = vunpack.c.h.b16 %v1570
    %v1639 = vunpack.c.l.b16 %v1571
    %v1640 = vunpack.c.h.b16 %v1571
    %v1641 = vunpack.c.l.b16 %v1572
    %v1642 = vunpack.c.h.b16 %v1572
    %v1643 = vunpack.c.l.b16 %v1573
    %v1644 = vunpack.c.h.b16 %v1573
    %v1645 = vunpack.c.l.b16 %v1574
    %v1646 = vunpack.c.h.b16 %v1574
    %v1647 = vunpack.c.l.b16 %v1575
    %v1648 = vunpack.c.h.b16 %v1575
    %v1649 = vunpack.c.l.b16 %v1576
    %v1650 = vunpack.c.h.b16 %v1576
    %v1651 = vunpack.c.l.b16 %v1577
    %v1652 = vunpack.c.h.b16 %v1577
    %v1653 = vunpack.c.l.b16 %v1578
    %v1654 = vunpack.c.h.b16 %v1578
    %v1655 = vunpack.c.l.b16 %v1579
    %v1656 = vunpack.c.h.b16 %v1579
    %v1657 = vunpack.c.l.b16 %v1580
    %v1658 = vunpack.c.h.b16 %v1580
    %v1659 = vunpack.c.l.b16 %v1581
    %v1660 = vunpack.c.h.b16 %v1581
    %v1661 = vunpack.c.l.b16 %v1582
    %v1662 = vunpack.c.h.b16 %v1582
    %v1663 = vunpack.c.l.b16 %v1583
    %v1664 = vunpack.c.h.b16 %v1583
    %v1665 = vunpack.c.l.b16 %v1584
    %v1666 = vunpack.c.h.b16 %v1584
    %v1667 = vunpack.c.l.b16 %v1585
    %v1668 = vunpack.c.h.b16 %v1585
    %v1669 = vunpack.c.l.b16 %v1586
    %v1670 = vunpack.c.h.b16 %v1586
    %v1671 = vunpack.c.l.b16 %v1587
    %v1672 = vunpack.c.h.b16 %v1587
    %v1673 = vunpack.c.l.b16 %v1588
    %v1674 = vunpack.c.h.b16 %v1588
    %v1675 = vunpack.c.l.b16 %v1589
    %v1676 = vunpack.c.h.b16 %v1589
    %v1677 = vunpack.c.l.b16 %v1590
    %v1678 = vunpack.c.h.b16 %v1590
    %v1679 = vunpack.c.l.b16 %v1591
    %v1680 = vunpack.c.h.b16 %v1591
    %v1681 = vunpack.c.l.b16 %v1592
    %v1682 = vunpack.c.h.b16 %v1592
    %v1683 = vunpack.c.l.b16 %v1593
    %v1684 = vunpack.c.h.b16 %v1593
    %v1685 = vunpack.c.l.b16 %v1594
    %v1686 = vunpack.c.h.b16 %v1594
    %v1687 = vunpack.c.l.b16 %v1595
    %v1688 = vunpack.c.h.b16 %v1595
    %v1689 = vunpack.c.l.b16 %v1596
    %v1690 = vunpack.c.h.b16 %v1596
    %v1691 = vunpack.c.l.b16 %v1597
    %v1692 = vunpack.c.h.b16 %v1597
    %v1693 = vunpack.c.l.b16 %v1598
    %v1694 = vunpack.c.h.b16 %v1598
    %v1695 = vpack.c.b16 %v1635, %v1631
    %v1696 = vpack.c.b16 %v1636, %v1632
    %v1697 = vpack.c.b16 %v1637, %v1633
    %v1698 = vpack.c.b16 %v1638, %v1634
    %v1699 = vpack.c.b16 %v1643, %v1639
    %v1700 = vpack.c.b16 %v1644, %v1640
    %v1701 = vpack.c.b16 %v1645, %v1641
    %v1702 = vpack.c.b16 %v1646, %v1642
    %v1703 = vpack.c.b16 %v1651, %v1647
    %v1704 = vpack.c.b16 %v1652, %v1648
    %v1705 = vpack.c.b16 %v1653, %v1649
    %v1706 = vpack.c.b16 %v1654, %v1650
    %v1707 = vpack.c.b16 %v1659, %v1655
    %v1708 = vpack.c.b16 %v1660, %v1656
    %v1709 = vpack.c.b16 %v1661, %v1657
    %v1710 = vpack.c.b16 %v1662, %v1658
    %v1711 = vpack.c.b16 %v1667, %v1663
    %v1712 = vpack.c.b16 %v1668, %v1664
    %v1713 = vpack.c.b16 %v1669, %v1665
    %v1714 = vpack.c.b16 %v1670, %v1666
    %v1715 = vpack.c.b16 %v1675, %v1671
    %v1716 = vpack.c.b16 %v1676, %v1672
    %v1717 = vpack.c.b16 %v1677, %v1673
    %v1718 = vpack.c.b16 %v1678, %v1674
    %v1719 = vpack.c.b16 %v1683, %v1679
    %v1720 = vpack.c.b16 %v1684, %v1680
    %v1721 = vpack.c.b16 %v1685, %v1681
    %v1722 = vpack.c.b16 %v1686, %v1682
    %v1723 = vpack.c.b16 %v1691, %v1687
    %v1724 = vpack.c.b16 %v1692, %v1688
    %v1725 = vpack.c.b16 %v1693, %v1689
    %v1726 = vpack.c.b16 %v1694, %v1690
    %1759 = vmatprep.subr.bf16.mxu0 %v1696
    %1760 = vmatpush1.bf16.msra.mxu0 %v1695
    %1761 = vmatprep.subr.bf16.mxu0 %v1700
    %1762 = vmatpush1.bf16.msra.mxu0 %v1699
    %1763 = vmatprep.subr.bf16.mxu0 %v1704
    %1764 = vmatpush1.bf16.msra.mxu0 %v1703
    %1765 = vmatprep.subr.bf16.mxu0 %v1708
    %1766 = vmatpush1.bf16.msra.mxu0 %v1707
    %1767 = vmatprep.subr.bf16.mxu0 %v1712
    %1768 = vmatpush1.bf16.msra.mxu0 %v1711
    %1769 = vmatprep.subr.bf16.mxu0 %v1716
    %1770 = vmatpush1.bf16.msra.mxu0 %v1715
    %1771 = vmatprep.subr.bf16.mxu0 %v1720
    %1772 = vmatpush1.bf16.msra.mxu0 %v1719
    %1773 = vmatprep.subr.bf16.mxu0 %v1724
    %1774 = vmatpush1.bf16.msra.mxu0 %v1723
    %1775 = vmatprep.subr.bf16.mxu0 0
    %1776 = vmatpush1.bf16.msra.mxu0 0
    %1777 = vmatprep.subr.bf16.mxu0 0
    %1778 = vmatpush1.bf16.msra.mxu0 0
    %1779 = vmatprep.subr.bf16.mxu0 0
    %1780 = vmatpush1.bf16.msra.mxu0 0
    %1781 = vmatprep.subr.bf16.mxu0 0
    %1782 = vmatpush1.bf16.msra.mxu0 0
    %1783 = vmatprep.subr.bf16.mxu0 0
    %1784 = vmatpush1.bf16.msra.mxu0 0
    %1785 = vmatprep.subr.bf16.mxu0 0
    %1786 = vmatpush1.bf16.msra.mxu0 0
    %1787 = vmatprep.subr.bf16.mxu0 0
    %1788 = vmatpush1.bf16.msra.mxu0 0
    %1789 = vmatprep.subr.bf16.mxu0 0
    %1790 = vmatpush1.bf16.msra.mxu0 0
    %1791 = vmatprep.mubr.bf16.mxu0 0
    %1792 = vmatmul.mubr.bf16.gmra.mrb[0].mxu0 %v1566
    %v1793 = vpop.f32.mrb[0].mxu0
    %v1794 = vadd.f32 0.0, %v1793
    %v1795 = vpop.f32.mrb[0].mxu0
    %v1796 = vadd.f32 0.0, %v1795
    %v1797 = vpop.f32.mrb[0].mxu0
    %v1798 = vpop.f32.mrb[0].mxu0
    %1799 = vdwg.mxu0
    %1800 = vmatprep.subr.bf16.mxu0 %v1698
    %1801 = vmatpush1.bf16.msra.mxu0 %v1697
    %1802 = vmatprep.subr.bf16.mxu0 %v1702
    %1803 = vmatpush1.bf16.msra.mxu0 %v1701
    %1804 = vmatprep.subr.bf16.mxu0 %v1706
    %1805 = vmatpush1.bf16.msra.mxu0 %v1705
    %1806 = vmatprep.subr.bf16.mxu0 %v1710
    %1807 = vmatpush1.bf16.msra.mxu0 %v1709
    %1808 = vmatprep.subr.bf16.mxu0 %v1714
    %1809 = vmatpush1.bf16.msra.mxu0 %v1713
    %1810 = vmatprep.subr.bf16.mxu0 %v1718
    %1811 = vmatpush1.bf16.msra.mxu0 %v1717
    %1812 = vmatprep.subr.bf16.mxu0 %v1722
    %1813 = vmatpush1.bf16.msra.mxu0 %v1721
    %1814 = vmatprep.subr.bf16.mxu0 %v1726
    %1815 = vmatpush1.bf16.msra.mxu0 %v1725
    %1816 = vmatprep.subr.bf16.mxu0 0
    %1817 = vmatpush1.bf16.msra.mxu0 0
    %1818 = vmatprep.subr.bf16.mxu0 0
    %1819 = vmatpush1.bf16.msra.mxu0 0
    %1820 = vmatprep.subr.bf16.mxu0 0
    %1821 = vmatpush1.bf16.msra.mxu0 0
    %1822 = vmatprep.subr.bf16.mxu0 0
    %1823 = vmatpush1.bf16.msra.mxu0 0
    %1824 = vmatprep.subr.bf16.mxu0 0
    %1825 = vmatpush1.bf16.msra.mxu0 0
    %1826 = vmatprep.subr.bf16.mxu0 0
    %1827 = vmatpush1.bf16.msra.mxu0 0
    %1828 = vmatprep.subr.bf16.mxu0 0
    %1829 = vmatpush1.bf16.msra.mxu0 0
    %1830 = vmatprep.subr.bf16.mxu0 0
    %1831 = vmatpush1.bf16.msra.mxu0 0
    %1832 = vmatprep.mubr.bf16.mxu0 0
    %1833 = vmatmul.mubr.bf16.gmra.mrb[0].mxu0 %v1566
    %v1834 = vpop.f32.mrb[0].mxu0
    %v1835 = vadd.f32 0.0, %v1834
    %v1836 = vpop.f32.mrb[0].mxu0
    %v1837 = vadd.f32 0.0, %v1836
    %v1838 = vpop.f32.mrb[0].mxu0
    %v1839 = vpop.f32.mrb[0].mxu0
    %1840 = vdwg.mxu0
    %v1849 = vunpack.c.l.b16 %v1526
    %v1850 = vunpack.c.l.b16 %v1527
    %v1851 = vunpack.c.l.b16 %v1528
    %v1852 = vunpack.c.l.b16 %v1529
    %v1853 = vunpack.c.l.b16 %v1530
    %v1854 = vunpack.c.l.b16 %v1531
    %v1855 = vunpack.c.l.b16 %v1532
    %v1856 = vunpack.c.l.b16 %v1533
    %v1857 = vrot.slane %v1850, 7
    %v1858 = vsel %vm514, %v1857, %v1849
    %v1859 = vrot.slane %v1851, 6
    %v1860 = vsel %vm516, %v1859, %v1858
    %v1861 = vrot.slane %v1852, 5
    %v1862 = vsel %vm518, %v1861, %v1860
    %v1863 = vrot.slane %v1853, 4
    %v1864 = vsel %vm520, %v1863, %v1862
    %v1865 = vrot.slane %v1854, 3
    %v1866 = vsel %vm522, %v1865, %v1864
    %v1867 = vrot.slane %v1855, 2
    %v1868 = vsel %vm524, %v1867, %v1866
    %v1869 = vrot.slane %v1856, 1
    %v1870 = vsel %vm526, %v1869, %v1868
    %v1871 = vpack.c.b16 %v1870, %v1870
    %v1905 = vunpack.c.l.b16 %v1534
    %v1906 = vunpack.c.h.b16 %v1534
    %v1907 = vunpack.c.l.b16 %v1535
    %v1908 = vunpack.c.h.b16 %v1535
    %v1909 = vunpack.c.l.b16 %v1536
    %v1910 = vunpack.c.h.b16 %v1536
    %v1911 = vunpack.c.l.b16 %v1537
    %v1912 = vunpack.c.h.b16 %v1537
    %v1913 = vunpack.c.l.b16 %v1538
    %v1914 = vunpack.c.h.b16 %v1538
    %v1915 = vunpack.c.l.b16 %v1539
    %v1916 = vunpack.c.h.b16 %v1539
    %v1917 = vunpack.c.l.b16 %v1540
    %v1918 = vunpack.c.h.b16 %v1540
    %v1919 = vunpack.c.l.b16 %v1541
    %v1920 = vunpack.c.h.b16 %v1541
    %v1921 = vunpack.c.l.b16 %v1542
    %v1922 = vunpack.c.h.b16 %v1542
    %v1923 = vunpack.c.l.b16 %v1543
    %v1924 = vunpack.c.h.b16 %v1543
    %v1925 = vunpack.c.l.b16 %v1544
    %v1926 = vunpack.c.h.b16 %v1544
    %v1927 = vunpack.c.l.b16 %v1545
    %v1928 = vunpack.c.h.b16 %v1545
    %v1929 = vunpack.c.l.b16 %v1546
    %v1930 = vunpack.c.h.b16 %v1546
    %v1931 = vunpack.c.l.b16 %v1547
    %v1932 = vunpack.c.h.b16 %v1547
    %v1933 = vunpack.c.l.b16 %v1548
    %v1934 = vunpack.c.h.b16 %v1548
    %v1935 = vunpack.c.l.b16 %v1549
    %v1936 = vunpack.c.h.b16 %v1549
    %v1937 = vunpack.c.l.b16 %v1550
    %v1938 = vunpack.c.h.b16 %v1550
    %v1939 = vunpack.c.l.b16 %v1551
    %v1940 = vunpack.c.h.b16 %v1551
    %v1941 = vunpack.c.l.b16 %v1552
    %v1942 = vunpack.c.h.b16 %v1552
    %v1943 = vunpack.c.l.b16 %v1553
    %v1944 = vunpack.c.h.b16 %v1553
    %v1945 = vunpack.c.l.b16 %v1554
    %v1946 = vunpack.c.h.b16 %v1554
    %v1947 = vunpack.c.l.b16 %v1555
    %v1948 = vunpack.c.h.b16 %v1555
    %v1949 = vunpack.c.l.b16 %v1556
    %v1950 = vunpack.c.h.b16 %v1556
    %v1951 = vunpack.c.l.b16 %v1557
    %v1952 = vunpack.c.h.b16 %v1557
    %v1953 = vunpack.c.l.b16 %v1558
    %v1954 = vunpack.c.h.b16 %v1558
    %v1955 = vunpack.c.l.b16 %v1559
    %v1956 = vunpack.c.h.b16 %v1559
    %v1957 = vunpack.c.l.b16 %v1560
    %v1958 = vunpack.c.h.b16 %v1560
    %v1959 = vunpack.c.l.b16 %v1561
    %v1960 = vunpack.c.h.b16 %v1561
    %v1961 = vunpack.c.l.b16 %v1562
    %v1962 = vunpack.c.h.b16 %v1562
    %v1963 = vunpack.c.l.b16 %v1563
    %v1964 = vunpack.c.h.b16 %v1563
    %v1965 = vunpack.c.l.b16 %v1564
    %v1966 = vunpack.c.h.b16 %v1564
    %v1967 = vunpack.c.l.b16 %v1565
    %v1968 = vunpack.c.h.b16 %v1565
    %v1969 = vpack.c.b16 %v1909, %v1905
    %v1970 = vpack.c.b16 %v1910, %v1906
    %v1971 = vpack.c.b16 %v1911, %v1907
    %v1972 = vpack.c.b16 %v1912, %v1908
    %v1973 = vpack.c.b16 %v1917, %v1913
    %v1974 = vpack.c.b16 %v1918, %v1914
    %v1975 = vpack.c.b16 %v1919, %v1915
    %v1976 = vpack.c.b16 %v1920, %v1916
    %v1977 = vpack.c.b16 %v1925, %v1921
    %v1978 = vpack.c.b16 %v1926, %v1922
    %v1979 = vpack.c.b16 %v1927, %v1923
    %v1980 = vpack.c.b16 %v1928, %v1924
    %v1981 = vpack.c.b16 %v1933, %v1929
    %v1982 = vpack.c.b16 %v1934, %v1930
    %v1983 = vpack.c.b16 %v1935, %v1931
    %v1984 = vpack.c.b16 %v1936, %v1932
    %v1985 = vpack.c.b16 %v1941, %v1937
    %v1986 = vpack.c.b16 %v1942, %v1938
    %v1987 = vpack.c.b16 %v1943, %v1939
    %v1988 = vpack.c.b16 %v1944, %v1940
    %v1989 = vpack.c.b16 %v1949, %v1945
    %v1990 = vpack.c.b16 %v1950, %v1946
    %v1991 = vpack.c.b16 %v1951, %v1947
    %v1992 = vpack.c.b16 %v1952, %v1948
    %v1993 = vpack.c.b16 %v1957, %v1953
    %v1994 = vpack.c.b16 %v1958, %v1954
    %v1995 = vpack.c.b16 %v1959, %v1955
    %v1996 = vpack.c.b16 %v1960, %v1956
    %v1997 = vpack.c.b16 %v1965, %v1961
    %v1998 = vpack.c.b16 %v1966, %v1962
    %v1999 = vpack.c.b16 %v1967, %v1963
    %v2000 = vpack.c.b16 %v1968, %v1964
    %2033 = vmatprep.subr.bf16.mxu0 %v1970
    %2034 = vmatpush1.bf16.msra.mxu0 %v1969
    %2035 = vmatprep.subr.bf16.mxu0 %v1974
    %2036 = vmatpush1.bf16.msra.mxu0 %v1973
    %2037 = vmatprep.subr.bf16.mxu0 %v1978
    %2038 = vmatpush1.bf16.msra.mxu0 %v1977
    %2039 = vmatprep.subr.bf16.mxu0 %v1982
    %2040 = vmatpush1.bf16.msra.mxu0 %v1981
    %2041 = vmatprep.subr.bf16.mxu0 %v1986
    %2042 = vmatpush1.bf16.msra.mxu0 %v1985
    %2043 = vmatprep.subr.bf16.mxu0 %v1990
    %2044 = vmatpush1.bf16.msra.mxu0 %v1989
    %2045 = vmatprep.subr.bf16.mxu0 %v1994
    %2046 = vmatpush1.bf16.msra.mxu0 %v1993
    %2047 = vmatprep.subr.bf16.mxu0 %v1998
    %2048 = vmatpush1.bf16.msra.mxu0 %v1997
    %2049 = vmatprep.subr.bf16.mxu0 0
    %2050 = vmatpush1.bf16.msra.mxu0 0
    %2051 = vmatprep.subr.bf16.mxu0 0
    %2052 = vmatpush1.bf16.msra.mxu0 0
    %2053 = vmatprep.subr.bf16.mxu0 0
    %2054 = vmatpush1.bf16.msra.mxu0 0
    %2055 = vmatprep.subr.bf16.mxu0 0
    %2056 = vmatpush1.bf16.msra.mxu0 0
    %2057 = vmatprep.subr.bf16.mxu0 0
    %2058 = vmatpush1.bf16.msra.mxu0 0
    %2059 = vmatprep.subr.bf16.mxu0 0
    %2060 = vmatpush1.bf16.msra.mxu0 0
    %2061 = vmatprep.subr.bf16.mxu0 0
    %2062 = vmatpush1.bf16.msra.mxu0 0
    %2063 = vmatprep.subr.bf16.mxu0 0
    %2064 = vmatpush1.bf16.msra.mxu0 0
    %2065 = vmatprep.mubr.bf16.mxu0 0
    %2066 = vmatmul.mubr.bf16.gmra.mrb[0].mxu0 %v1871
    %v2067 = vpop.f32.mrb[0].mxu0
    %v2068 = vadd.f32 %v1794, %v2067
    %v2069 = vpop.f32.mrb[0].mxu0
    %v2070 = vadd.f32 %v1796, %v2069
    %v2071 = vpop.f32.mrb[0].mxu0
    %v2072 = vpop.f32.mrb[0].mxu0
    %2073 = vdwg.mxu0
    %2074 = vmatprep.subr.bf16.mxu0 %v1972
    %2075 = vmatpush1.bf16.msra.mxu0 %v1971
    %2076 = vmatprep.subr.bf16.mxu0 %v1976
    %2077 = vmatpush1.bf16.msra.mxu0 %v1975
    %2078 = vmatprep.subr.bf16.mxu0 %v1980
    %2079 = vmatpush1.bf16.msra.mxu0 %v1979
    %2080 = vmatprep.subr.bf16.mxu0 %v1984
    %2081 = vmatpush1.bf16.msra.mxu0 %v1983
    %2082 = vmatprep.subr.bf16.mxu0 %v1988
    %2083 = vmatpush1.bf16.msra.mxu0 %v1987
    %2084 = vmatprep.subr.bf16.mxu0 %v1992
    %2085 = vmatpush1.bf16.msra.mxu0 %v1991
    %2086 = vmatprep.subr.bf16.mxu0 %v1996
    %2087 = vmatpush1.bf16.msra.mxu0 %v1995
    %2088 = vmatprep.subr.bf16.mxu0 %v2000
    %2089 = vmatpush1.bf16.msra.mxu0 %v1999
    %2090 = vmatprep.subr.bf16.mxu0 0
    %2091 = vmatpush1.bf16.msra.mxu0 0
    %2092 = vmatprep.subr.bf16.mxu0 0
    %2093 = vmatpush1.bf16.msra.mxu0 0
    %2094 = vmatprep.subr.bf16.mxu0 0
    %2095 = vmatpush1.bf16.msra.mxu0 0
    %2096 = vmatprep.subr.bf16.mxu0 0
    %2097 = vmatpush1.bf16.msra.mxu0 0
    %2098 = vmatprep.subr.bf16.mxu0 0
    %2099 = vmatpush1.bf16.msra.mxu0 0
    %2100 = vmatprep.subr.bf16.mxu0 0
    %2101 = vmatpush1.bf16.msra.mxu0 0
    %2102 = vmatprep.subr.bf16.mxu0 0
    %2103 = vmatpush1.bf16.msra.mxu0 0
    %2104 = vmatprep.subr.bf16.mxu0 0
    %2105 = vmatpush1.bf16.msra.mxu0 0
    %2106 = vmatprep.mubr.bf16.mxu0 0
    %2107 = vmatmul.mubr.bf16.gmra.mrb[0].mxu0 %v1871
    %v2108 = vpop.f32.mrb[0].mxu0
    %v2109 = vadd.f32 %v1835, %v2108
    %v2110 = vpop.f32.mrb[0].mxu0
    %v2111 = vadd.f32 %v1837, %v2110
    %v2112 = vpop.f32.mrb[0].mxu0
    %v2113 = vpop.f32.mrb[0].mxu0
    %2114 = vdwg.mxu0
    %v2115 = vld [vmem:[%s8] sm:$0xf]
    %v2117 = vlaneseq
    %v2118 = vshrl.u32 %v2117, 7
    %v2119 = vsub.s32 0, %v2118
    %v2120 = vrot.slane %v2115, %v2119
    %v2121 = vlaneseq
    %v2122 = vshrl.u32 %v2121, 7
    %v2123 = vsub.s32 1, %v2122
    %v2124 = vrot.slane %v2115, %v2123
    %v2125 = vlaneseq
    %v2126 = vshrl.u32 %v2125, 7
    %v2127 = vsub.s32 2, %v2126
    %v2128 = vrot.slane %v2115, %v2127
    %v2129 = vlaneseq
    %v2130 = vshrl.u32 %v2129, 7
    %v2131 = vsub.s32 3, %v2130
    %v2132 = vrot.slane %v2115, %v2131
    %v2137 = vadd.f32 %v2068, %v2120
    %v2138 = vadd.f32 %v2070, %v2124
    %v2139 = vadd.f32 %v2109, %v2128
    %v2140 = vadd.f32 %v2111, %v2132
    %v2141 = vxor.u32 %v2137, 2147483648
    %v2142 = vmul.f32 %v2141, 1.442695
    %v2143 = vpow.pop %v2142
    %v2144 = vadd.f32 %v2143, 1.0
    %v2145 = vrcp.pop %v2144
    %v2146 = vmul.f32 1.0, %v2145
    %v2147 = vxor.u32 %v2138, 2147483648
    %v2148 = vmul.f32 %v2147, 1.442695
    %v2149 = vpow.pop %v2148
    %v2150 = vadd.f32 %v2149, 1.0
    %v2151 = vrcp.pop %v2150
    %v2152 = vmul.f32 1.0, %v2151
    %v2153 = vtanh.pop %v2139
    %v2154 = vxor.u32 %v2140, 2147483648
    %v2155 = vmul.f32 %v2154, 1.442695
    %v2156 = vpow.pop %v2155
    %v2157 = vadd.f32 %v2156, 1.0
    %v2158 = vrcp.pop %v2157
    %v2159 = vmul.f32 1.0, %v2158
    %v2160 = vmul.f32 %v2152, %v1525
    %v2161 = vmul.f32 %v2146, %v2153
    %v2162 = vadd.f32 %v2160, %v2161
    %v2163 = vtanh.pop %v2162
    %v2164 = vmul.f32 %v2159, %v2163
    %2165 = vst [vmem:[%s17] sm:$0xff] %v2164
    %2166 = vst [vmem:[%s18] sm:$0xff] %v2162
    %v2167 = vld [vmem:[%s14] sm:$0xff]
    %v2168 = vld [vmem:[%s15] sm:$0xff]
    %v2169 = vpack.c.bf16 %v2164, %v2164
    %v2170 = vld [vmem:[#allocation4] sm:$0xff]
    %v2171 = vld [vmem:[#allocation4 + $0x8] sm:$0xff]
    %v2172 = vld [vmem:[#allocation4 + $0x10] sm:$0xff]
    %v2173 = vld [vmem:[#allocation4 + $0x18] sm:$0xff]
    %v2174 = vld [vmem:[#allocation4 + $0x20] sm:$0xff]
    %v2175 = vld [vmem:[#allocation4 + $0x28] sm:$0xff]
    %v2176 = vld [vmem:[#allocation4 + $0x30] sm:$0xff]
    %v2177 = vld [vmem:[#allocation4 + $0x38] sm:$0xff]
    %v2178 = vld [vmem:[#allocation4 + $0x40] sm:$0xff]
    %v2179 = vld [vmem:[#allocation4 + $0x48] sm:$0xff]
    %v2180 = vld [vmem:[#allocation4 + $0x50] sm:$0xff]
    %v2181 = vld [vmem:[#allocation4 + $0x58] sm:$0xff]
    %v2182 = vld [vmem:[#allocation4 + $0x60] sm:$0xff]
    %v2183 = vld [vmem:[#allocation4 + $0x68] sm:$0xff]
    %v2184 = vld [vmem:[#allocation4 + $0x70] sm:$0xff]
    %v2185 = vld [vmem:[#allocation4 + $0x78] sm:$0xff]
    %v2186 = vld [vmem:[#allocation4 + $0x80] sm:$0xff]
    %v2187 = vld [vmem:[#allocation4 + $0x88] sm:$0xff]
    %v2188 = vld [vmem:[#allocation4 + $0x90] sm:$0xff]
    %v2189 = vld [vmem:[#allocation4 + $0x98] sm:$0xff]
    %v2190 = vld [vmem:[#allocation4 + $0xa0] sm:$0xff]
    %v2191 = vld [vmem:[#allocation4 + $0xa8] sm:$0xff]
    %v2192 = vld [vmem:[#allocation4 + $0xb0] sm:$0xff]
    %v2193 = vld [vmem:[#allocation4 + $0xb8] sm:$0xff]
    %v2194 = vld [vmem:[#allocation4 + $0xc0] sm:$0xff]
    %v2195 = vld [vmem:[#allocation4 + $0xc8] sm:$0xff]
    %v2196 = vld [vmem:[#allocation4 + $0xd0] sm:$0xff]
    %v2197 = vld [vmem:[#allocation4 + $0xd8] sm:$0xff]
    %v2198 = vld [vmem:[#allocation4 + $0xe0] sm:$0xff]
    %v2199 = vld [vmem:[#allocation4 + $0xe8] sm:$0xff]
    %v2200 = vld [vmem:[#allocation4 + $0xf0] sm:$0xff]
    %v2201 = vld [vmem:[#allocation4 + $0xf8] sm:$0xff]
    %v2202 = vpack.c.bf16 %v2167, %v2167
    %v2203 = vld [vmem:[#allocation6] sm:$0xff]
    %v2204 = vld [vmem:[#allocation6 + $0x8] sm:$0xff]
    %v2205 = vld [vmem:[#allocation6 + $0x10] sm:$0xff]
    %v2206 = vld [vmem:[#allocation6 + $0x18] sm:$0xff]
    %v2207 = vld [vmem:[#allocation6 + $0x20] sm:$0xff]
    %v2208 = vld [vmem:[#allocation6 + $0x28] sm:$0xff]
    %v2209 = vld [vmem:[#allocation6 + $0x30] sm:$0xff]
    %v2210 = vld [vmem:[#allocation6 + $0x38] sm:$0xff]
    %v2211 = vld [vmem:[#allocation6 + $0x40] sm:$0xff]
    %v2212 = vld [vmem:[#allocation6 + $0x48] sm:$0xff]
    %v2213 = vld [vmem:[#allocation6 + $0x50] sm:$0xff]
    %v2214 = vld [vmem:[#allocation6 + $0x58] sm:$0xff]
    %v2215 = vld [vmem:[#allocation6 + $0x60] sm:$0xff]
    %v2216 = vld [vmem:[#allocation6 + $0x68] sm:$0xff]
    %v2217 = vld [vmem:[#allocation6 + $0x70] sm:$0xff]
    %v2218 = vld [vmem:[#allocation6 + $0x78] sm:$0xff]
    %v2219 = vld [vmem:[#allocation6 + $0x80] sm:$0xff]
    %v2220 = vld [vmem:[#allocation6 + $0x88] sm:$0xff]
    %v2221 = vld [vmem:[#allocation6 + $0x90] sm:$0xff]
    %v2222 = vld [vmem:[#allocation6 + $0x98] sm:$0xff]
    %v2223 = vld [vmem:[#allocation6 + $0xa0] sm:$0xff]
    %v2224 = vld [vmem:[#allocation6 + $0xa8] sm:$0xff]
    %v2225 = vld [vmem:[#allocation6 + $0xb0] sm:$0xff]
    %v2226 = vld [vmem:[#allocation6 + $0xb8] sm:$0xff]
    %v2227 = vld [vmem:[#allocation6 + $0xc0] sm:$0xff]
    %v2228 = vld [vmem:[#allocation6 + $0xc8] sm:$0xff]
    %v2229 = vld [vmem:[#allocation6 + $0xd0] sm:$0xff]
    %v2230 = vld [vmem:[#allocation6 + $0xd8] sm:$0xff]
    %v2231 = vld [vmem:[#allocation6 + $0xe0] sm:$0xff]
    %v2232 = vld [vmem:[#allocation6 + $0xe8] sm:$0xff]
    %v2233 = vld [vmem:[#allocation6 + $0xf0] sm:$0xff]
    %v2234 = vld [vmem:[#allocation6 + $0xf8] sm:$0xff]
    %v2267 = vunpack.c.l.b16 %v2203
    %v2268 = vunpack.c.h.b16 %v2203
    %v2269 = vunpack.c.l.b16 %v2204
    %v2270 = vunpack.c.h.b16 %v2204
    %v2271 = vunpack.c.l.b16 %v2205
    %v2272 = vunpack.c.h.b16 %v2205
    %v2273 = vunpack.c.l.b16 %v2206
    %v2274 = vunpack.c.h.b16 %v2206
    %v2275 = vunpack.c.l.b16 %v2207
    %v2276 = vunpack.c.h.b16 %v2207
    %v2277 = vunpack.c.l.b16 %v2208
    %v2278 = vunpack.c.h.b16 %v2208
    %v2279 = vunpack.c.l.b16 %v2209
    %v2280 = vunpack.c.h.b16 %v2209
    %v2281 = vunpack.c.l.b16 %v2210
    %v2282 = vunpack.c.h.b16 %v2210
    %v2283 = vunpack.c.l.b16 %v2211
    %v2284 = vunpack.c.h.b16 %v2211
    %v2285 = vunpack.c.l.b16 %v2212
    %v2286 = vunpack.c.h.b16 %v2212
    %v2287 = vunpack.c.l.b16 %v2213
    %v2288 = vunpack.c.h.b16 %v2213
    %v2289 = vunpack.c.l.b16 %v2214
    %v2290 = vunpack.c.h.b16 %v2214
    %v2291 = vunpack.c.l.b16 %v2215
    %v2292 = vunpack.c.h.b16 %v2215
    %v2293 = vunpack.c.l.b16 %v2216
    %v2294 = vunpack.c.h.b16 %v2216
    %v2295 = vunpack.c.l.b16 %v2217
    %v2296 = vunpack.c.h.b16 %v2217
    %v2297 = vunpack.c.l.b16 %v2218
    %v2298 = vunpack.c.h.b16 %v2218
    %v2299 = vunpack.c.l.b16 %v2219
    %v2300 = vunpack.c.h.b16 %v2219
    %v2301 = vunpack.c.l.b16 %v2220
    %v2302 = vunpack.c.h.b16 %v2220
    %v2303 = vunpack.c.l.b16 %v2221
    %v2304 = vunpack.c.h.b16 %v2221
    %v2305 = vunpack.c.l.b16 %v2222
    %v2306 = vunpack.c.h.b16 %v2222
    %v2307 = vunpack.c.l.b16 %v2223
    %v2308 = vunpack.c.h.b16 %v2223
    %v2309 = vunpack.c.l.b16 %v2224
    %v2310 = vunpack.c.h.b16 %v2224
    %v2311 = vunpack.c.l.b16 %v2225
    %v2312 = vunpack.c.h.b16 %v2225
    %v2313 = vunpack.c.l.b16 %v2226
    %v2314 = vunpack.c.h.b16 %v2226
    %v2315 = vunpack.c.l.b16 %v2227
    %v2316 = vunpack.c.h.b16 %v2227
    %v2317 = vunpack.c.l.b16 %v2228
    %v2318 = vunpack.c.h.b16 %v2228
    %v2319 = vunpack.c.l.b16 %v2229
    %v2320 = vunpack.c.h.b16 %v2229
    %v2321 = vunpack.c.l.b16 %v2230
    %v2322 = vunpack.c.h.b16 %v2230
    %v2323 = vunpack.c.l.b16 %v2231
    %v2324 = vunpack.c.h.b16 %v2231
    %v2325 = vunpack.c.l.b16 %v2232
    %v2326 = vunpack.c.h.b16 %v2232
    %v2327 = vunpack.c.l.b16 %v2233
    %v2328 = vunpack.c.h.b16 %v2233
    %v2329 = vunpack.c.l.b16 %v2234
    %v2330 = vunpack.c.h.b16 %v2234
    %v2331 = vpack.c.b16 %v2271, %v2267
    %v2332 = vpack.c.b16 %v2272, %v2268
    %v2333 = vpack.c.b16 %v2273, %v2269
    %v2334 = vpack.c.b16 %v2274, %v2270
    %v2335 = vpack.c.b16 %v2279, %v2275
    %v2336 = vpack.c.b16 %v2280, %v2276
    %v2337 = vpack.c.b16 %v2281, %v2277
    %v2338 = vpack.c.b16 %v2282, %v2278
    %v2339 = vpack.c.b16 %v2287, %v2283
    %v2340 = vpack.c.b16 %v2288, %v2284
    %v2341 = vpack.c.b16 %v2289, %v2285
    %v2342 = vpack.c.b16 %v2290, %v2286
    %v2343 = vpack.c.b16 %v2295, %v2291
    %v2344 = vpack.c.b16 %v2296, %v2292
    %v2345 = vpack.c.b16 %v2297, %v2293
    %v2346 = vpack.c.b16 %v2298, %v2294
    %v2347 = vpack.c.b16 %v2303, %v2299
    %v2348 = vpack.c.b16 %v2304, %v2300
    %v2349 = vpack.c.b16 %v2305, %v2301
    %v2350 = vpack.c.b16 %v2306, %v2302
    %v2351 = vpack.c.b16 %v2311, %v2307
    %v2352 = vpack.c.b16 %v2312, %v2308
    %v2353 = vpack.c.b16 %v2313, %v2309
    %v2354 = vpack.c.b16 %v2314, %v2310
    %v2355 = vpack.c.b16 %v2319, %v2315
    %v2356 = vpack.c.b16 %v2320, %v2316
    %v2357 = vpack.c.b16 %v2321, %v2317
    %v2358 = vpack.c.b16 %v2322, %v2318
    %v2359 = vpack.c.b16 %v2327, %v2323
    %v2360 = vpack.c.b16 %v2328, %v2324
    %v2361 = vpack.c.b16 %v2329, %v2325
    %v2362 = vpack.c.b16 %v2330, %v2326
    %2395 = vmatprep.subr.bf16.mxu0 %v2332
    %2396 = vmatpush1.bf16.msra.mxu0 %v2331
    %2397 = vmatprep.subr.bf16.mxu0 %v2336
    %2398 = vmatpush1.bf16.msra.mxu0 %v2335
    %2399 = vmatprep.subr.bf16.mxu0 %v2340
    %2400 = vmatpush1.bf16.msra.mxu0 %v2339
    %2401 = vmatprep.subr.bf16.mxu0 %v2344
    %2402 = vmatpush1.bf16.msra.mxu0 %v2343
    %2403 = vmatprep.subr.bf16.mxu0 %v2348
    %2404 = vmatpush1.bf16.msra.mxu0 %v2347
    %2405 = vmatprep.subr.bf16.mxu0 %v2352
    %2406 = vmatpush1.bf16.msra.mxu0 %v2351
    %2407 = vmatprep.subr.bf16.mxu0 %v2356
    %2408 = vmatpush1.bf16.msra.mxu0 %v2355
    %2409 = vmatprep.subr.bf16.mxu0 %v2360
    %2410 = vmatpush1.bf16.msra.mxu0 %v2359
    %2411 = vmatprep.subr.bf16.mxu0 0
    %2412 = vmatpush1.bf16.msra.mxu0 0
    %2413 = vmatprep.subr.bf16.mxu0 0
    %2414 = vmatpush1.bf16.msra.mxu0 0
    %2415 = vmatprep.subr.bf16.mxu0 0
    %2416 = vmatpush1.bf16.msra.mxu0 0
    %2417 = vmatprep.subr.bf16.mxu0 0
    %2418 = vmatpush1.bf16.msra.mxu0 0
    %2419 = vmatprep.subr.bf16.mxu0 0
    %2420 = vmatpush1.bf16.msra.mxu0 0
    %2421 = vmatprep.subr.bf16.mxu0 0
    %2422 = vmatpush1.bf16.msra.mxu0 0
    %2423 = vmatprep.subr.bf16.mxu0 0
    %2424 = vmatpush1.bf16.msra.mxu0 0
    %2425 = vmatprep.subr.bf16.mxu0 0
    %2426 = vmatpush1.bf16.msra.mxu0 0
    %2427 = vmatprep.mubr.bf16.mxu0 0
    %2428 = vmatmul.mubr.bf16.gmra.mrb[0].mxu0 %v2202
    %v2429 = vpop.f32.mrb[0].mxu0
    %v2430 = vadd.f32 0.0, %v2429
    %v2431 = vpop.f32.mrb[0].mxu0
    %v2432 = vadd.f32 0.0, %v2431
    %v2433 = vpop.f32.mrb[0].mxu0
    %v2434 = vpop.f32.mrb[0].mxu0
    %2435 = vdwg.mxu0
    %2436 = vmatprep.subr.bf16.mxu0 %v2334
    %2437 = vmatpush1.bf16.msra.mxu0 %v2333
    %2438 = vmatprep.subr.bf16.mxu0 %v2338
    %2439 = vmatpush1.bf16.msra.mxu0 %v2337
    %2440 = vmatprep.subr.bf16.mxu0 %v2342
    %2441 = vmatpush1.bf16.msra.mxu0 %v2341
    %2442 = vmatprep.subr.bf16.mxu0 %v2346
    %2443 = vmatpush1.bf16.msra.mxu0 %v2345
    %2444 = vmatprep.subr.bf16.mxu0 %v2350
    %2445 = vmatpush1.bf16.msra.mxu0 %v2349
    %2446 = vmatprep.subr.bf16.mxu0 %v2354
    %2447 = vmatpush1.bf16.msra.mxu0 %v2353
    %2448 = vmatprep.subr.bf16.mxu0 %v2358
    %2449 = vmatpush1.bf16.msra.mxu0 %v2357
    %2450 = vmatprep.subr.bf16.mxu0 %v2362
    %2451 = vmatpush1.bf16.msra.mxu0 %v2361
    %2452 = vmatprep.subr.bf16.mxu0 0
    %2453 = vmatpush1.bf16.msra.mxu0 0
    %2454 = vmatprep.subr.bf16.mxu0 0
    %2455 = vmatpush1.bf16.msra.mxu0 0
    %2456 = vmatprep.subr.bf16.mxu0 0
    %2457 = vmatpush1.bf16.msra.mxu0 0
    %2458 = vmatprep.subr.bf16.mxu0 0
    %2459 = vmatpush1.bf16.msra.mxu0 0
    %2460 = vmatprep.subr.bf16.mxu0 0
    %2461 = vmatpush1.bf16.msra.mxu0 0
    %2462 = vmatprep.subr.bf16.mxu0 0
    %2463 = vmatpush1.bf16.msra.mxu0 0
    %2464 = vmatprep.subr.bf16.mxu0 0
    %2465 = vmatpush1.bf16.msra.mxu0 0
    %2466 = vmatprep.subr.bf16.mxu0 0
    %2467 = vmatpush1.bf16.msra.mxu0 0
    %2468 = vmatprep.mubr.bf16.mxu0 0
    %2469 = vmatmul.mubr.bf16.gmra.mrb[0].mxu0 %v2202
    %v2470 = vpop.f32.mrb[0].mxu0
    %v2471 = vadd.f32 0.0, %v2470
    %v2472 = vpop.f32.mrb[0].mxu0
    %v2473 = vadd.f32 0.0, %v2472
    %v2474 = vpop.f32.mrb[0].mxu0
    %v2475 = vpop.f32.mrb[0].mxu0
    %2476 = vdwg.mxu0
    %v2509 = vunpack.c.l.b16 %v2170
    %v2510 = vunpack.c.h.b16 %v2170
    %v2511 = vunpack.c.l.b16 %v2171
    %v2512 = vunpack.c.h.b16 %v2171
    %v2513 = vunpack.c.l.b16 %v2172
    %v2514 = vunpack.c.h.b16 %v2172
    %v2515 = vunpack.c.l.b16 %v2173
    %v2516 = vunpack.c.h.b16 %v2173
    %v2517 = vunpack.c.l.b16 %v2174
    %v2518 = vunpack.c.h.b16 %v2174
    %v2519 = vunpack.c.l.b16 %v2175
    %v2520 = vunpack.c.h.b16 %v2175
    %v2521 = vunpack.c.l.b16 %v2176
    %v2522 = vunpack.c.h.b16 %v2176
    %v2523 = vunpack.c.l.b16 %v2177
    %v2524 = vunpack.c.h.b16 %v2177
    %v2525 = vunpack.c.l.b16 %v2178
    %v2526 = vunpack.c.h.b16 %v2178
    %v2527 = vunpack.c.l.b16 %v2179
    %v2528 = vunpack.c.h.b16 %v2179
    %v2529 = vunpack.c.l.b16 %v2180
    %v2530 = vunpack.c.h.b16 %v2180
    %v2531 = vunpack.c.l.b16 %v2181
    %v2532 = vunpack.c.h.b16 %v2181
    %v2533 = vunpack.c.l.b16 %v2182
    %v2534 = vunpack.c.h.b16 %v2182
    %v2535 = vunpack.c.l.b16 %v2183
    %v2536 = vunpack.c.h.b16 %v2183
    %v2537 = vunpack.c.l.b16 %v2184
    %v2538 = vunpack.c.h.b16 %v2184
    %v2539 = vunpack.c.l.b16 %v2185
    %v2540 = vunpack.c.h.b16 %v2185
    %v2541 = vunpack.c.l.b16 %v2186
    %v2542 = vunpack.c.h.b16 %v2186
    %v2543 = vunpack.c.l.b16 %v2187
    %v2544 = vunpack.c.h.b16 %v2187
    %v2545 = vunpack.c.l.b16 %v2188
    %v2546 = vunpack.c.h.b16 %v2188
    %v2547 = vunpack.c.l.b16 %v2189
    %v2548 = vunpack.c.h.b16 %v2189
    %v2549 = vunpack.c.l.b16 %v2190
    %v2550 = vunpack.c.h.b16 %v2190
    %v2551 = vunpack.c.l.b16 %v2191
    %v2552 = vunpack.c.h.b16 %v2191
    %v2553 = vunpack.c.l.b16 %v2192
    %v2554 = vunpack.c.h.b16 %v2192
    %v2555 = vunpack.c.l.b16 %v2193
    %v2556 = vunpack.c.h.b16 %v2193
    %v2557 = vunpack.c.l.b16 %v2194
    %v2558 = vunpack.c.h.b16 %v2194
    %v2559 = vunpack.c.l.b16 %v2195
    %v2560 = vunpack.c.h.b16 %v2195
    %v2561 = vunpack.c.l.b16 %v2196
    %v2562 = vunpack.c.h.b16 %v2196
    %v2563 = vunpack.c.l.b16 %v2197
    %v2564 = vunpack.c.h.b16 %v2197
    %v2565 = vunpack.c.l.b16 %v2198
    %v2566 = vunpack.c.h.b16 %v2198
    %v2567 = vunpack.c.l.b16 %v2199
    %v2568 = vunpack.c.h.b16 %v2199
    %v2569 = vunpack.c.l.b16 %v2200
    %v2570 = vunpack.c.h.b16 %v2200
    %v2571 = vunpack.c.l.b16 %v2201
    %v2572 = vunpack.c.h.b16 %v2201
    %v2573 = vpack.c.b16 %v2513, %v2509
    %v2574 = vpack.c.b16 %v2514, %v2510
    %v2575 = vpack.c.b16 %v2515, %v2511
    %v2576 = vpack.c.b16 %v2516, %v2512
    %v2577 = vpack.c.b16 %v2521, %v2517
    %v2578 = vpack.c.b16 %v2522, %v2518
    %v2579 = vpack.c.b16 %v2523, %v2519
    %v2580 = vpack.c.b16 %v2524, %v2520
    %v2581 = vpack.c.b16 %v2529, %v2525
    %v2582 = vpack.c.b16 %v2530, %v2526
    %v2583 = vpack.c.b16 %v2531, %v2527
    %v2584 = vpack.c.b16 %v2532, %v2528
    %v2585 = vpack.c.b16 %v2537, %v2533
    %v2586 = vpack.c.b16 %v2538, %v2534
    %v2587 = vpack.c.b16 %v2539, %v2535
    %v2588 = vpack.c.b16 %v2540, %v2536
    %v2589 = vpack.c.b16 %v2545, %v2541
    %v2590 = vpack.c.b16 %v2546, %v2542
    %v2591 = vpack.c.b16 %v2547, %v2543
    %v2592 = vpack.c.b16 %v2548, %v2544
    %v2593 = vpack.c.b16 %v2553, %v2549
    %v2594 = vpack.c.b16 %v2554, %v2550
    %v2595 = vpack.c.b16 %v2555, %v2551
    %v2596 = vpack.c.b16 %v2556, %v2552
    %v2597 = vpack.c.b16 %v2561, %v2557
    %v2598 = vpack.c.b16 %v2562, %v2558
    %v2599 = vpack.c.b16 %v2563, %v2559
    %v2600 = vpack.c.b16 %v2564, %v2560
    %v2601 = vpack.c.b16 %v2569, %v2565
    %v2602 = vpack.c.b16 %v2570, %v2566
    %v2603 = vpack.c.b16 %v2571, %v2567
    %v2604 = vpack.c.b16 %v2572, %v2568
    %2637 = vmatprep.subr.bf16.mxu0 %v2574
    %2638 = vmatpush1.bf16.msra.mxu0 %v2573
    %2639 = vmatprep.subr.bf16.mxu0 %v2578
    %2640 = vmatpush1.bf16.msra.mxu0 %v2577
    %2641 = vmatprep.subr.bf16.mxu0 %v2582
    %2642 = vmatpush1.bf16.msra.mxu0 %v2581
    %2643 = vmatprep.subr.bf16.mxu0 %v2586
    %2644 = vmatpush1.bf16.msra.mxu0 %v2585
    %2645 = vmatprep.subr.bf16.mxu0 %v2590
    %2646 = vmatpush1.bf16.msra.mxu0 %v2589
    %2647 = vmatprep.subr.bf16.mxu0 %v2594
    %2648 = vmatpush1.bf16.msra.mxu0 %v2593
    %2649 = vmatprep.subr.bf16.mxu0 %v2598
    %2650 = vmatpush1.bf16.msra.mxu0 %v2597
    %2651 = vmatprep.subr.bf16.mxu0 %v2602
    %2652 = vmatpush1.bf16.msra.mxu0 %v2601
    %2653 = vmatprep.subr.bf16.mxu0 0
    %2654 = vmatpush1.bf16.msra.mxu0 0
    %2655 = vmatprep.subr.bf16.mxu0 0
    %2656 = vmatpush1.bf16.msra.mxu0 0
    %2657 = vmatprep.subr.bf16.mxu0 0
    %2658 = vmatpush1.bf16.msra.mxu0 0
    %2659 = vmatprep.subr.bf16.mxu0 0
    %2660 = vmatpush1.bf16.msra.mxu0 0
    %2661 = vmatprep.subr.bf16.mxu0 0
    %2662 = vmatpush1.bf16.msra.mxu0 0
    %2663 = vmatprep.subr.bf16.mxu0 0
    %2664 = vmatpush1.bf16.msra.mxu0 0
    %2665 = vmatprep.subr.bf16.mxu0 0
    %2666 = vmatpush1.bf16.msra.mxu0 0
    %2667 = vmatprep.subr.bf16.mxu0 0
    %2668 = vmatpush1.bf16.msra.mxu0 0
    %2669 = vmatprep.mubr.bf16.mxu0 0
    %2670 = vmatmul.mubr.bf16.gmra.mrb[0].mxu0 %v2169
    %v2671 = vpop.f32.mrb[0].mxu0
    %v2672 = vadd.f32 %v2430, %v2671
    %v2673 = vpop.f32.mrb[0].mxu0
    %v2674 = vadd.f32 %v2432, %v2673
    %v2675 = vpop.f32.mrb[0].mxu0
    %v2676 = vpop.f32.mrb[0].mxu0
    %2677 = vdwg.mxu0
    %2678 = vmatprep.subr.bf16.mxu0 %v2576
    %2679 = vmatpush1.bf16.msra.mxu0 %v2575
    %2680 = vmatprep.subr.bf16.mxu0 %v2580
    %2681 = vmatpush1.bf16.msra.mxu0 %v2579
    %2682 = vmatprep.subr.bf16.mxu0 %v2584
    %2683 = vmatpush1.bf16.msra.mxu0 %v2583
    %2684 = vmatprep.subr.bf16.mxu0 %v2588
    %2685 = vmatpush1.bf16.msra.mxu0 %v2587
    %2686 = vmatprep.subr.bf16.mxu0 %v2592
    %2687 = vmatpush1.bf16.msra.mxu0 %v2591
    %2688 = vmatprep.subr.bf16.mxu0 %v2596
    %2689 = vmatpush1.bf16.msra.mxu0 %v2595
    %2690 = vmatprep.subr.bf16.mxu0 %v2600
    %2691 = vmatpush1.bf16.msra.mxu0 %v2599
    %2692 = vmatprep.subr.bf16.mxu0 %v2604
    %2693 = vmatpush1.bf16.msra.mxu0 %v2603
    %2694 = vmatprep.subr.bf16.mxu0 0
    %2695 = vmatpush1.bf16.msra.mxu0 0
    %2696 = vmatprep.subr.bf16.mxu0 0
    %2697 = vmatpush1.bf16.msra.mxu0 0
    %2698 = vmatprep.subr.bf16.mxu0 0
    %2699 = vmatpush1.bf16.msra.mxu0 0
    %2700 = vmatprep.subr.bf16.mxu0 0
    %2701 = vmatpush1.bf16.msra.mxu0 0
    %2702 = vmatprep.subr.bf16.mxu0 0
    %2703 = vmatpush1.bf16.msra.mxu0 0
    %2704 = vmatprep.subr.bf16.mxu0 0
    %2705 = vmatpush1.bf16.msra.mxu0 0
    %2706 = vmatprep.subr.bf16.mxu0 0
    %2707 = vmatpush1.bf16.msra.mxu0 0
    %2708 = vmatprep.subr.bf16.mxu0 0
    %2709 = vmatpush1.bf16.msra.mxu0 0
    %2710 = vmatprep.mubr.bf16.mxu0 0
    %2711 = vmatmul.mubr.bf16.gmra.mrb[0].mxu0 %v2169
    %v2712 = vpop.f32.mrb[0].mxu0
    %v2713 = vadd.f32 %v2471, %v2712
    %v2714 = vpop.f32.mrb[0].mxu0
    %v2715 = vadd.f32 %v2473, %v2714
    %v2716 = vpop.f32.mrb[0].mxu0
    %v2717 = vpop.f32.mrb[0].mxu0
    %2718 = vdwg.mxu0
    %v2719 = vld [vmem:[%s13] sm:$0xf]
    %v2721 = vlaneseq
    %v2722 = vshrl.u32 %v2721, 7
    %v2723 = vsub.s32 0, %v2722
    %v2724 = vrot.slane %v2719, %v2723
    %v2725 = vlaneseq
    %v2726 = vshrl.u32 %v2725, 7
    %v2727 = vsub.s32 1, %v2726
    %v2728 = vrot.slane %v2719, %v2727
    %v2729 = vlaneseq
    %v2730 = vshrl.u32 %v2729, 7
    %v2731 = vsub.s32 2, %v2730
    %v2732 = vrot.slane %v2719, %v2731
    %v2733 = vlaneseq
    %v2734 = vshrl.u32 %v2733, 7
    %v2735 = vsub.s32 3, %v2734
    %v2736 = vrot.slane %v2719, %v2735
    %v2741 = vadd.f32 %v2672, %v2724
    %v2742 = vadd.f32 %v2674, %v2728
    %v2743 = vadd.f32 %v2713, %v2732
    %v2744 = vadd.f32 %v2715, %v2736
    %v2745 = vxor.u32 %v2741, 2147483648
    %v2746 = vmul.f32 %v2745, 1.442695
    %v2747 = vpow.pop %v2746
    %v2748 = vadd.f32 %v2747, 1.0
    %v2749 = vrcp.pop %v2748
    %v2750 = vmul.f32 1.0, %v2749
    %v2751 = vxor.u32 %v2742, 2147483648
    %v2752 = vmul.f32 %v2751, 1.442695
    %v2753 = vpow.pop %v2752
    %v2754 = vadd.f32 %v2753, 1.0
    %v2755 = vrcp.pop %v2754
    %v2756 = vmul.f32 1.0, %v2755
    %v2757 = vtanh.pop %v2743
    %v2758 = vxor.u32 %v2744, 2147483648
    %v2759 = vmul.f32 %v2758, 1.442695
    %v2760 = vpow.pop %v2759
    %v2761 = vadd.f32 %v2760, 1.0
    %v2762 = vrcp.pop %v2761
    %v2763 = vmul.f32 1.0, %v2762
    %v2764 = vmul.f32 %v2756, %v2168
    %v2765 = vmul.f32 %v2750, %v2757
    %v2766 = vadd.f32 %v2764, %v2765
    %v2767 = vtanh.pop %v2766
    %v2768 = vmul.f32 %v2763, %v2767
    %2769 = vst [vmem:[%s19] sm:$0xff] %v2768
    %2770 = vst [vmem:[%s20] sm:$0xff] %v2766
    // Predicated region
    $region78: #{decoder_with_attention_forward.1} parent=1 // pred_check
      _
    $region79: #{decoder_with_attention_forward.1} parent=1 // pred_check_branch
      %2772 = sbr.rel (0) target = $region81
    $region80: #{decoder_with_attention_forward.1} parent=1 // pred_region
      _
    $region81: #{decoder_with_attention_forward.1} parent=1 // pred_fallthru
      _
    // Predicated region
    $region82: #{decoder_with_attention_forward.1} parent=1 // pred_check
      _
    $region83: #{decoder_with_attention_forward.1} parent=1 // pred_check_branch
      %2774 = sbr.rel (0) target = $region85
    $region84: #{decoder_with_attention_forward.1} parent=1 // pred_region
      _
    $region85: #{decoder_with_attention_forward.1} parent=1 // pred_fallthru
      _
    // Predicated region
    $region86: #{decoder_with_attention_forward.1} parent=1 // pred_check
      _
    $region87: #{decoder_with_attention_forward.1} parent=1 // pred_check_branch
      %2776 = sbr.rel (0) target = $region89
    $region88: #{decoder_with_attention_forward.1} parent=1 // pred_region
      _
    $region89: #{decoder_with_attention_forward.1} parent=1 // pred_fallthru
      _
    // Predicated region
    $region90: #{decoder_with_attention_forward.1} parent=1 // pred_check
      _
    $region91: #{decoder_with_attention_forward.1} parent=1 // pred_check_branch
      %2778 = sbr.rel (0) target = $region93
    $region92: #{decoder_with_attention_forward.1} parent=1 // pred_region
      _
    $region93: #{decoder_with_attention_forward.1} parent=1 // pred_fallthru
      _
    // Predicated region
    $region94: #{decoder_with_attention_forward.1} parent=1 // pred_check
      _
    $region95: #{decoder_with_attention_forward.1} parent=1 // pred_check_branch
      %2780 = sbr.rel (0) target = $region97
    $region96: #{decoder_with_attention_forward.1} parent=1 // pred_region
      _
    $region97: #{decoder_with_attention_forward.1} parent=1 // pred_fallthru
      _
    // Predicated region
    $region98: #{decoder_with_attention_forward.1} parent=1 // pred_check
      _
    $region99: #{decoder_with_attention_forward.1} parent=1 // pred_check_branch
      %2782 = sbr.rel (0) target = $region101
    $region100: #{decoder_with_attention_forward.1} parent=1 // pred_region
      _
    $region101: #{decoder_with_attention_forward.1} parent=1 // pred_fallthru
      _
    // Predicated region
    $region102: #{decoder_with_attention_forward.1} parent=1 // pred_check
      _
    $region103: #{decoder_with_attention_forward.1} parent=1 // pred_check_branch
      %2784 = sbr.rel (0) target = $region105
    $region104: #{decoder_with_attention_forward.1} parent=1 // pred_region
      _
    $region105: #{decoder_with_attention_forward.1} parent=1 // pred_fallthru
      _
    // Predicated region
    $region106: #{decoder_with_attention_forward.1} parent=1 // pred_check
      _
    $region107: #{decoder_with_attention_forward.1} parent=1 // pred_check_branch
      %2786 = sbr.rel (0) target = $region109
    $region108: #{decoder_with_attention_forward.1} parent=1 // pred_region
      _
    $region109: #{decoder_with_attention_forward.1} parent=1 // pred_fallthru
      _
    // Predicated region
    $region110: #{decoder_with_attention_forward.1} parent=1 // pred_check
      _
    $region111: #{decoder_with_attention_forward.1} parent=1 // pred_check_branch
      %2788 = sbr.rel (0) target = $region113
    $region112: #{decoder_with_attention_forward.1} parent=1 // pred_region
      _
    $region113: #{decoder_with_attention_forward.1} parent=1 // pred_fallthru
      _
    // Predicated region
    $region114: #{decoder_with_attention_forward.1} parent=1 // pred_check
      _
    $region115: #{decoder_with_attention_forward.1} parent=1 // pred_check_branch
      %2790 = sbr.rel (0) target = $region117
    $region116: #{decoder_with_attention_forward.1} parent=1 // pred_region
      _
    $region117: #{decoder_with_attention_forward.1} parent=1 // pred_fallthru
      _
    %2791 = vsyncpa [#allocation3], 1
    %2792 = vsyncpa [#allocation5], 1

</llo_original>
